<compile_context>
chip_gen: v7x
topology: tpu7x:2x2x1
jax: 0.10.0
libtpu: 0.0.40
codegen_flags: <defaults>
</compile_context>

<pallas_src>
import jax
import jax.numpy as jnp
from jax.experimental import pallas as pl
from jax.experimental.pallas import tpu as pltpu


_VMEM = pl.BlockSpec(memory_space=pltpu.MemorySpace.VMEM)


# ----------------------------------------------------------------------------
# Fused Pallas kernel: n_layers mLSTM cells + final Linear, one invocation.
# ----------------------------------------------------------------------------
def _make_fused_kernel(n_layers, hidden_size, compute_dtype):
    """Builds the fused kernel body for a fixed (static) layer count.

    Per layer (sentneuron mLSTM, gate order i, f, o, u):
        xproj = x @ [Wmx | Wx]                # one fused matmul, [B, 5H]
        m     = xproj[:, :H] * (h @ Wmh)
        gates = xproj[:, H:] + m @ Wh + bh
        cy    = sigmoid(f) * c + sigmoid(i) * tanh(u)
        hy    = sigmoid(o) * tanh(cy)
    Residual add between stacked layers (emb_x = emb_x + hy for i > 0).
    Final:  y = emb_x @ Wh2y + bh2y
    """
    H = hidden_size

    def kernel(*refs):
        x_ref, h0_ref, c0_ref = refs[0:3]
        layer_refs = refs[3:3 + 4 * n_layers]
        h2y_w_ref, h2y_b_ref = refs[3 + 4 * n_layers:5 + 4 * n_layers]
        h1_ref, c1_ref, y_ref = refs[5 + 4 * n_layers:]

        x = x_ref[...].astype(jnp.float32)            # running emb_x, f32
        for i in range(n_layers):
            wxcat_ref, wmh_ref, wh_ref, bh_ref = layer_refs[4 * i:4 * i + 4]
            h_prev = h0_ref[i]                        # [B, H] f32
            c_prev = c0_ref[i]                        # [B, H] f32

            # bf16 operands, f32 accumulation on the MXU.
            xproj = jnp.dot(x.astype(compute_dtype), wxcat_ref[...],
                            preferred_element_type=jnp.float32)       # [B, 5H]
            mh = jnp.dot(h_prev.astype(compute_dtype), wmh_ref[...],
                         preferred_element_type=jnp.float32)          # [B, H]
            m = xproj[:, :H] * mh                                     # [B, H]
            gates = (xproj[:, H:]
                     + jnp.dot(m.astype(compute_dtype), wh_ref[...],
                               preferred_element_type=jnp.float32)
                     + bh_ref[...])                                   # [B, 4H]

            # Elementwise gate math in f32 (v5e-safe). 128-aligned slices.
            sig = jax.nn.sigmoid(gates[:, 0:3 * H])   # i | f | o in one EUP pass
            i_g = sig[:, 0 * H:1 * H]
            f_g = sig[:, 1 * H:2 * H]
            o_g = sig[:, 2 * H:3 * H]
            u_g = jnp.tanh(gates[:, 3 * H:4 * H])

            cy = f_g * c_prev + i_g * u_g
            hy = o_g * jnp.tanh(cy)

            h1_ref[i] = hy                            # write straight into [L,B,H]
            c1_ref[i] = cy
            # Dropout(p=0) / eval mode -> identity; residual add from layer 1.
            x = hy if i == 0 else x + hy

        y_ref[...] = (jnp.dot(x.astype(compute_dtype), h2y_w_ref[...],
                              preferred_element_type=jnp.float32)
                      + h2y_b_ref[...])

    return kernel


def sentiment_neuron_fused(emb_x, h0, c0, kparams,
                           compute_dtype=jnp.bfloat16):
    """One pallas_call covering all stacked mLSTM layers + the h2y Linear."""
    n_layers, B, H = h0.shape
    O = kparams['h2y_w'].shape[1]

    inputs = [emb_x, h0, c0]
    for layer in kparams['layers']:
        inputs += [layer['wxcat'], layer['wmh'], layer['wh'], layer['bh']]
    inputs += [kparams['h2y_w'], kparams['h2y_b']]

    kernel = _make_fused_kernel(n_layers, H, compute_dtype)
    return pl.pallas_call(
        kernel,
        out_shape=(jax.ShapeDtypeStruct((n_layers, B, H), jnp.float32),
                   jax.ShapeDtypeStruct((n_layers, B, H), jnp.float32),
                   jax.ShapeDtypeStruct((B, O), jnp.float32)),
        in_specs=[_VMEM] * len(inputs),
        out_specs=(_VMEM, _VMEM, _VMEM),
    )(*inputs)


# ----------------------------------------------------------------------------
# SentimentNeuron forward (embedding gather in XLA, everything else in Pallas)
# ----------------------------------------------------------------------------
@jax.jit
def sentiment_neuron_forward(x_ids, h, kparams):
    """x_ids: [B] int32 token ids; h = (h0, c0), each [n_layers, B, H].
    Returns ((h1, c1), y) with y: [B, output_size]."""
    emb_x = jnp.take(kparams['emb'], x_ids, axis=0)   # [B, E], fused by XLA
    h0, c0 = h
    h1, c1, y = sentiment_neuron_fused(emb_x, h0, c0, kparams)
    return (h1, c1), y


# ----------------------------------------------------------------------------
# Parameter construction (f32 masters) and kernel-side packing (bf16 weights)
# ----------------------------------------------------------------------------
def make_params(key, input_size, embed_size, hidden_size, output_size, n_layers):
    keys = jax.random.split(key, 2 + 5 * n_layers)
    k = iter(keys)
    params = {
        'emb': jax.random.normal(next(k), (input_size, embed_size),
                                 jnp.float32) * 0.1,
        'layers': [],
    }
    in_size = embed_size
    for _ in range(n_layers):
        layer = {
            'wmx': jax.random.normal(next(k), (in_size, hidden_size), jnp.float32) * 0.1,
            'wmh': jax.random.normal(next(k), (hidden_size, hidden_size), jnp.float32) * 0.1,
            'wx':  jax.random.normal(next(k), (in_size, 4 * hidden_size), jnp.float32) * 0.1,
            'wh':  jax.random.normal(next(k), (hidden_size, 4 * hidden_size), jnp.float32) * 0.1,
            'bh':  jnp.zeros((1, 4 * hidden_size), jnp.float32),
        }
        params['layers'].append(layer)
        in_size = hidden_size
    params['h2y_w'] = jax.random.normal(next(k), (hidden_size, output_size),
                                        jnp.float32) * 0.1
    params['h2y_b'] = jnp.zeros((1, output_size), jnp.float32)
    return params


def pack_params(params, compute_dtype=jnp.bfloat16):
    """Concatenate [Wmx | Wx] per layer and cast matmul weights to bf16."""
    packed = {'emb': params['emb'], 'layers': []}
    for layer in params['layers']:
        packed['layers'].append({
            'wxcat': jnp.concatenate([layer['wmx'], layer['wx']],
                                     axis=1).astype(compute_dtype),
            'wmh': layer['wmh'].astype(compute_dtype),
            'wh':  layer['wh'].astype(compute_dtype),
            'bh':  layer['bh'],                       # bias stays f32
        })
    packed['h2y_w'] = params['h2y_w'].astype(compute_dtype)
    packed['h2y_b'] = params['h2y_b']
    return packed


# ----------------------------------------------------------------------------
# Plain-JAX references for verification
# ----------------------------------------------------------------------------
def _reference_forward_f32(x_ids, h, params):
    emb_x = jnp.take(params['emb'], x_ids, axis=0)
    h0, c0 = h
    H = h0.shape[-1]
    h1, c1 = [], []
    for i, layer in enumerate(params['layers']):
        m = (emb_x @ layer['wmx']) * (h0[i] @ layer['wmh'])
        gates = emb_x @ layer['wx'] + m @ layer['wh'] + layer['bh']
        i_g = jax.nn.sigmoid(gates[:, 0 * H:1 * H])
        f_g = jax.nn.sigmoid(gates[:, 1 * H:2 * H])
        o_g = jax.nn.sigmoid(gates[:, 2 * H:3 * H])
        u_g = jnp.tanh(gates[:, 3 * H:4 * H])
        cy = f_g * c0[i] + i_g * u_g
        hy = o_g * jnp.tanh(cy)
        emb_x = hy if i == 0 else emb_x + hy
        h1.append(hy)
        c1.append(cy)
    y = emb_x @ params['h2y_w'] + params['h2y_b']
    return (jnp.stack(h1), jnp.stack(c1)), y


def _reference_forward_bf16(x_ids, h, kparams, compute_dtype=jnp.bfloat16):
    """Mirrors the kernel's dtype pattern (bf16 matmuls, f32 accumulate)."""
    emb_x = jnp.take(kparams['emb'], x_ids, axis=0)
    h0, c0 = h
    H = h0.shape[-1]
    x = emb_x.astype(jnp.float32)
    h1, c1 = [], []
    for i, layer in enumerate(kparams['layers']):
        xproj = jnp.dot(x.astype(compute_dtype), layer['wxcat'],
                        preferred_element_type=jnp.float32)
        mh = jnp.dot(h0[i].astype(compute_dtype), layer['wmh'],
                     preferred_element_type=jnp.float32)
        m = xproj[:, :H] * mh
        gates = (xproj[:, H:]
                 + jnp.dot(m.astype(compute_dtype), layer['wh'],
                           preferred_element_type=jnp.float32)
                 + layer['bh'])
        i_g = jax.nn.sigmoid(gates[:, 0 * H:1 * H])
        f_g = jax.nn.sigmoid(gates[:, 1 * H:2 * H])
        o_g = jax.nn.sigmoid(gates[:, 2 * H:3 * H])
        u_g = jnp.tanh(gates[:, 3 * H:4 * H])
        cy = f_g * c0[i] + i_g * u_g
        hy = o_g * jnp.tanh(cy)
        h1.append(hy)
        c1.append(cy)
        x = hy if i == 0 else x + hy
    y = (jnp.dot(x.astype(compute_dtype), kparams['h2y_w'],
                 preferred_element_type=jnp.float32) + kparams['h2y_b'])
    return (jnp.stack(h1), jnp.stack(c1)), y


if __name__ == "__main__":
    # Small shapes, chosen 128-lane aligned (H=128, output=256).
    input_size, embed_size, hidden_size, output_size = 256, 64, 128, 256
    n_layers, batch = 2, 8

    key = jax.random.PRNGKey(0)
    k_params, k_x, k_h, k_c = jax.random.split(key, 4)

    params = make_params(k_params, input_size, embed_size, hidden_size,
                         output_size, n_layers)
    kparams = pack_params(params, jnp.bfloat16)

    x = jax.random.randint(k_x, (batch,), 0, input_size, dtype=jnp.int32)
    # init_hidden would be zeros; use small random values to exercise all paths.
    h0 = jax.random.normal(k_h, (n_layers, batch, hidden_size), jnp.float32) * 0.1
    c0 = jax.random.normal(k_c, (n_layers, batch, hidden_size), jnp.float32) * 0.1

    (h1, c1), y = sentiment_neuron_forward(x, (h0, c0), kparams)
    jax.block_until_ready((h1, c1, y))

    assert h1.shape == (n_layers, batch, hidden_size)
    assert c1.shape == (n_layers, batch, hidden_size)
    assert y.shape == (batch, output_size)

    # 1) Tight check vs. a reference that mirrors the kernel's bf16/f32 pattern.
    (h1_b, c1_b), y_b = _reference_forward_bf16(x, (h0, c0), kparams)
    assert jnp.allclose(h1, h1_b, atol=2e-3), float(jnp.max(jnp.abs(h1 - h1_b)))
    assert jnp.allclose(c1, c1_b, atol=2e-3), float(jnp.max(jnp.abs(c1 - c1_b)))
    assert jnp.allclose(y, y_b, atol=2e-3), float(jnp.max(jnp.abs(y - y_b)))

    # 2) Looser check vs. the pure-f32 module semantics (bf16 matmul weights).
    (h1_f, c1_f), y_f = _reference_forward_f32(x, (h0, c0), params)
    assert jnp.allclose(h1, h1_f, atol=5e-2)
    assert jnp.allclose(c1, c1_f, atol=5e-2)
    assert jnp.allclose(y, y_f, atol=5e-2)

    print("KERNEL_OK")
</pallas_src>

<mosaic_0001>
module attributes {stable_mosaic.version = 11 : i64} {
  func.func @kernel(%arg0: memref<8x64xf32, #tpu.memory_space<vmem>>, %arg1: memref<2x8x128xf32, #tpu.memory_space<vmem>>, %arg2: memref<2x8x128xf32, #tpu.memory_space<vmem>>, %arg3: memref<64x640xbf16, #tpu.memory_space<vmem>>, %arg4: memref<128x128xbf16, #tpu.memory_space<vmem>>, %arg5: memref<128x512xbf16, #tpu.memory_space<vmem>>, %arg6: memref<1x512xf32, #tpu.memory_space<vmem>>, %arg7: memref<128x640xbf16, #tpu.memory_space<vmem>>, %arg8: memref<128x128xbf16, #tpu.memory_space<vmem>>, %arg9: memref<128x512xbf16, #tpu.memory_space<vmem>>, %arg10: memref<1x512xf32, #tpu.memory_space<vmem>>, %arg11: memref<128x256xbf16, #tpu.memory_space<vmem>>, %arg12: memref<1x256xf32, #tpu.memory_space<vmem>>, %arg13: memref<2x8x128xf32, #tpu.memory_space<vmem>>, %arg14: memref<2x8x128xf32, #tpu.memory_space<vmem>>, %arg15: memref<8x256xf32, #tpu.memory_space<vmem>>) attributes {dimension_semantics = [], scalar_prefetch = 0 : i64, scratch_operands = 0 : i64, tpu.core_type = #tpu.core_type<tc>} {
    %c0 = arith.constant 0 : index
    %c0_0 = arith.constant 0 : index
    %0 = vector.load %arg0[%c0, %c0_0] : memref<8x64xf32, #tpu.memory_space<vmem>>, vector<8x64xf32>
    %c0_1 = arith.constant 0 : index
    %c0_2 = arith.constant 0 : index
    %c0_3 = arith.constant 0 : index
    %1 = vector.load %arg1[%c0_1, %c0_2, %c0_3] : memref<2x8x128xf32, #tpu.memory_space<vmem>>, vector<1x8x128xf32>
    %2 = vector.shape_cast %1 : vector<1x8x128xf32> to vector<8x128xf32>
    %c0_4 = arith.constant 0 : index
    %c0_5 = arith.constant 0 : index
    %c0_6 = arith.constant 0 : index
    %3 = vector.load %arg2[%c0_4, %c0_5, %c0_6] : memref<2x8x128xf32, #tpu.memory_space<vmem>>, vector<1x8x128xf32>
    %4 = vector.shape_cast %3 : vector<1x8x128xf32> to vector<8x128xf32>
    %5 = arith.truncf %0 : vector<8x64xf32> to vector<8x64xbf16>
    %c0_7 = arith.constant 0 : index
    %c0_8 = arith.constant 0 : index
    %6 = vector.load %arg3[%c0_7, %c0_8] : memref<64x640xbf16, #tpu.memory_space<vmem>>, vector<64x640xbf16>
    %cst = arith.constant dense<0.000000e+00> : vector<8x640xf32>
    %7 = tpu.matmul %5, %6, %cst {dimension_numbers = #tpu.dot_dimension_numbers<[1], [0], [0], [1], [0, 0, 1, 1], [], []>} : vector<8x64xbf16>, vector<64x640xbf16>, vector<8x640xf32> -> vector<8x640xf32>
    %8 = arith.truncf %2 : vector<8x128xf32> to vector<8x128xbf16>
    %c0_9 = arith.constant 0 : index
    %c0_10 = arith.constant 0 : index
    %9 = vector.load %arg4[%c0_9, %c0_10] : memref<128x128xbf16, #tpu.memory_space<vmem>>, vector<128x128xbf16>
    %cst_11 = arith.constant dense<0.000000e+00> : vector<8x128xf32>
    %10 = tpu.matmul %8, %9, %cst_11 {dimension_numbers = #tpu.dot_dimension_numbers<[1], [0], [0], [1], [0, 0, 1, 1], [], []>} : vector<8x128xbf16>, vector<128x128xbf16>, vector<8x128xf32> -> vector<8x128xf32>
    %11 = vector.extract_strided_slice %7 {offsets = [0, 0], sizes = [8, 128], strides = [1, 1]} : vector<8x640xf32> to vector<8x128xf32>
    %12 = arith.mulf %11, %10 : vector<8x128xf32>
    %13 = vector.extract_strided_slice %7 {offsets = [0, 128], sizes = [8, 512], strides = [1, 1]} : vector<8x640xf32> to vector<8x512xf32>
    %14 = arith.truncf %12 : vector<8x128xf32> to vector<8x128xbf16>
    %c0_12 = arith.constant 0 : index
    %c0_13 = arith.constant 0 : index
    %15 = vector.load %arg5[%c0_12, %c0_13] : memref<128x512xbf16, #tpu.memory_space<vmem>>, vector<128x512xbf16>
    %cst_14 = arith.constant dense<0.000000e+00> : vector<8x512xf32>
    %16 = tpu.matmul %14, %15, %cst_14 {dimension_numbers = #tpu.dot_dimension_numbers<[1], [0], [0], [1], [0, 0, 1, 1], [], []>} : vector<8x128xbf16>, vector<128x512xbf16>, vector<8x512xf32> -> vector<8x512xf32>
    %17 = arith.addf %13, %16 : vector<8x512xf32>
    %c0_15 = arith.constant 0 : index
    %c0_16 = arith.constant 0 : index
    %18 = vector.load %arg6[%c0_15, %c0_16] : memref<1x512xf32, #tpu.memory_space<vmem>>, vector<1x512xf32>
    %19 = vector.broadcast %18 : vector<1x512xf32> to vector<8x512xf32>
    %20 = arith.addf %17, %19 : vector<8x512xf32>
    %21 = vector.extract_strided_slice %20 {offsets = [0, 0], sizes = [8, 384], strides = [1, 1]} : vector<8x512xf32> to vector<8x384xf32>
    %22 = arith.negf %21 : vector<8x384xf32>
    %23 = math.exp %22 : vector<8x384xf32>
    %cst_17 = arith.constant 1.000000e+00 : f32
    %24 = vector.broadcast %cst_17 : f32 to vector<8x384xf32>
    %25 = arith.addf %24, %23 : vector<8x384xf32>
    %26 = arith.divf %24, %25 : vector<8x384xf32>
    %27 = vector.extract_strided_slice %26 {offsets = [0, 0], sizes = [8, 128], strides = [1, 1]} : vector<8x384xf32> to vector<8x128xf32>
    %28 = vector.extract_strided_slice %26 {offsets = [0, 128], sizes = [8, 128], strides = [1, 1]} : vector<8x384xf32> to vector<8x128xf32>
    %29 = vector.extract_strided_slice %26 {offsets = [0, 256], sizes = [8, 128], strides = [1, 1]} : vector<8x384xf32> to vector<8x128xf32>
    %30 = vector.extract_strided_slice %20 {offsets = [0, 384], sizes = [8, 128], strides = [1, 1]} : vector<8x512xf32> to vector<8x128xf32>
    %31 = math.tanh %30 : vector<8x128xf32>
    %32 = arith.mulf %28, %4 : vector<8x128xf32>
    %33 = arith.mulf %27, %31 : vector<8x128xf32>
    %34 = arith.addf %32, %33 : vector<8x128xf32>
    %35 = math.tanh %34 : vector<8x128xf32>
    %36 = arith.mulf %29, %35 : vector<8x128xf32>
    %c0_18 = arith.constant 0 : index
    %c0_19 = arith.constant 0 : index
    %c0_20 = arith.constant 0 : index
    %37 = vector.load %arg13[%c0_18, %c0_19, %c0_20] : memref<2x8x128xf32, #tpu.memory_space<vmem>>, vector<1x8x128xf32>
    %38 = vector.shape_cast %37 : vector<1x8x128xf32> to vector<8x128xf32>
    %39 = vector.shape_cast %36 : vector<8x128xf32> to vector<1x8x128xf32>
    tpu.vector_store %arg13[%c0_18, %c0_19, %c0_20], %39 {strides = array<i32>} : memref<2x8x128xf32, #tpu.memory_space<vmem>>, vector<1x8x128xf32>,
    %c0_21 = arith.constant 0 : index
    %c0_22 = arith.constant 0 : index
    %c0_23 = arith.constant 0 : index
    %40 = vector.load %arg14[%c0_21, %c0_22, %c0_23] : memref<2x8x128xf32, #tpu.memory_space<vmem>>, vector<1x8x128xf32>
    %41 = vector.shape_cast %40 : vector<1x8x128xf32> to vector<8x128xf32>
    %42 = vector.shape_cast %34 : vector<8x128xf32> to vector<1x8x128xf32>
    tpu.vector_store %arg14[%c0_21, %c0_22, %c0_23], %42 {strides = array<i32>} : memref<2x8x128xf32, #tpu.memory_space<vmem>>, vector<1x8x128xf32>,
    %c1 = arith.constant 1 : index
    %c0_24 = arith.constant 0 : index
    %c0_25 = arith.constant 0 : index
    %43 = vector.load %arg1[%c1, %c0_24, %c0_25] : memref<2x8x128xf32, #tpu.memory_space<vmem>>, vector<1x8x128xf32>
    %44 = vector.shape_cast %43 : vector<1x8x128xf32> to vector<8x128xf32>
    %c1_26 = arith.constant 1 : index
    %c0_27 = arith.constant 0 : index
    %c0_28 = arith.constant 0 : index
    %45 = vector.load %arg2[%c1_26, %c0_27, %c0_28] : memref<2x8x128xf32, #tpu.memory_space<vmem>>, vector<1x8x128xf32>
    %46 = vector.shape_cast %45 : vector<1x8x128xf32> to vector<8x128xf32>
    %47 = arith.truncf %36 : vector<8x128xf32> to vector<8x128xbf16>
    %c0_29 = arith.constant 0 : index
    %c0_30 = arith.constant 0 : index
    %48 = vector.load %arg7[%c0_29, %c0_30] : memref<128x640xbf16, #tpu.memory_space<vmem>>, vector<128x640xbf16>
    %cst_31 = arith.constant dense<0.000000e+00> : vector<8x640xf32>
    %49 = tpu.matmul %47, %48, %cst_31 {dimension_numbers = #tpu.dot_dimension_numbers<[1], [0], [0], [1], [0, 0, 1, 1], [], []>} : vector<8x128xbf16>, vector<128x640xbf16>, vector<8x640xf32> -> vector<8x640xf32>
    %50 = arith.truncf %44 : vector<8x128xf32> to vector<8x128xbf16>
    %c0_32 = arith.constant 0 : index
    %c0_33 = arith.constant 0 : index
    %51 = vector.load %arg8[%c0_32, %c0_33] : memref<128x128xbf16, #tpu.memory_space<vmem>>, vector<128x128xbf16>
    %cst_34 = arith.constant dense<0.000000e+00> : vector<8x128xf32>
    %52 = tpu.matmul %50, %51, %cst_34 {dimension_numbers = #tpu.dot_dimension_numbers<[1], [0], [0], [1], [0, 0, 1, 1], [], []>} : vector<8x128xbf16>, vector<128x128xbf16>, vector<8x128xf32> -> vector<8x128xf32>
    %53 = vector.extract_strided_slice %49 {offsets = [0, 0], sizes = [8, 128], strides = [1, 1]} : vector<8x640xf32> to vector<8x128xf32>
    %54 = arith.mulf %53, %52 : vector<8x128xf32>
    %55 = vector.extract_strided_slice %49 {offsets = [0, 128], sizes = [8, 512], strides = [1, 1]} : vector<8x640xf32> to vector<8x512xf32>
    %56 = arith.truncf %54 : vector<8x128xf32> to vector<8x128xbf16>
    %c0_35 = arith.constant 0 : index
    %c0_36 = arith.constant 0 : index
    %57 = vector.load %arg9[%c0_35, %c0_36] : memref<128x512xbf16, #tpu.memory_space<vmem>>, vector<128x512xbf16>
    %cst_37 = arith.constant dense<0.000000e+00> : vector<8x512xf32>
    %58 = tpu.matmul %56, %57, %cst_37 {dimension_numbers = #tpu.dot_dimension_numbers<[1], [0], [0], [1], [0, 0, 1, 1], [], []>} : vector<8x128xbf16>, vector<128x512xbf16>, vector<8x512xf32> -> vector<8x512xf32>
    %59 = arith.addf %55, %58 : vector<8x512xf32>
    %c0_38 = arith.constant 0 : index
    %c0_39 = arith.constant 0 : index
    %60 = vector.load %arg10[%c0_38, %c0_39] : memref<1x512xf32, #tpu.memory_space<vmem>>, vector<1x512xf32>
    %61 = vector.broadcast %60 : vector<1x512xf32> to vector<8x512xf32>
    %62 = arith.addf %59, %61 : vector<8x512xf32>
    %63 = vector.extract_strided_slice %62 {offsets = [0, 0], sizes = [8, 384], strides = [1, 1]} : vector<8x512xf32> to vector<8x384xf32>
    %64 = arith.negf %63 : vector<8x384xf32>
    %65 = math.exp %64 : vector<8x384xf32>
    %cst_40 = arith.constant 1.000000e+00 : f32
    %66 = vector.broadcast %cst_40 : f32 to vector<8x384xf32>
    %67 = arith.addf %66, %65 : vector<8x384xf32>
    %68 = arith.divf %66, %67 : vector<8x384xf32>
    %69 = vector.extract_strided_slice %68 {offsets = [0, 0], sizes = [8, 128], strides = [1, 1]} : vector<8x384xf32> to vector<8x128xf32>
    %70 = vector.extract_strided_slice %68 {offsets = [0, 128], sizes = [8, 128], strides = [1, 1]} : vector<8x384xf32> to vector<8x128xf32>
    %71 = vector.extract_strided_slice %68 {offsets = [0, 256], sizes = [8, 128], strides = [1, 1]} : vector<8x384xf32> to vector<8x128xf32>
    %72 = vector.extract_strided_slice %62 {offsets = [0, 384], sizes = [8, 128], strides = [1, 1]} : vector<8x512xf32> to vector<8x128xf32>
    %73 = math.tanh %72 : vector<8x128xf32>
    %74 = arith.mulf %70, %46 : vector<8x128xf32>
    %75 = arith.mulf %69, %73 : vector<8x128xf32>
    %76 = arith.addf %74, %75 : vector<8x128xf32>
    %77 = math.tanh %76 : vector<8x128xf32>
    %78 = arith.mulf %71, %77 : vector<8x128xf32>
    %c1_41 = arith.constant 1 : index
    %c0_42 = arith.constant 0 : index
    %c0_43 = arith.constant 0 : index
    %79 = vector.load %arg13[%c1_41, %c0_42, %c0_43] : memref<2x8x128xf32, #tpu.memory_space<vmem>>, vector<1x8x128xf32>
    %80 = vector.shape_cast %79 : vector<1x8x128xf32> to vector<8x128xf32>
    %81 = vector.shape_cast %78 : vector<8x128xf32> to vector<1x8x128xf32>
    tpu.vector_store %arg13[%c1_41, %c0_42, %c0_43], %81 {strides = array<i32>} : memref<2x8x128xf32, #tpu.memory_space<vmem>>, vector<1x8x128xf32>,
    %c1_44 = arith.constant 1 : index
    %c0_45 = arith.constant 0 : index
    %c0_46 = arith.constant 0 : index
    %82 = vector.load %arg14[%c1_44, %c0_45, %c0_46] : memref<2x8x128xf32, #tpu.memory_space<vmem>>, vector<1x8x128xf32>
    %83 = vector.shape_cast %82 : vector<1x8x128xf32> to vector<8x128xf32>
    %84 = vector.shape_cast %76 : vector<8x128xf32> to vector<1x8x128xf32>
    tpu.vector_store %arg14[%c1_44, %c0_45, %c0_46], %84 {strides = array<i32>} : memref<2x8x128xf32, #tpu.memory_space<vmem>>, vector<1x8x128xf32>,
    %85 = arith.addf %36, %78 : vector<8x128xf32>
    %86 = arith.truncf %85 : vector<8x128xf32> to vector<8x128xbf16>
    %c0_47 = arith.constant 0 : index
    %c0_48 = arith.constant 0 : index
    %87 = vector.load %arg11[%c0_47, %c0_48] : memref<128x256xbf16, #tpu.memory_space<vmem>>, vector<128x256xbf16>
    %cst_49 = arith.constant dense<0.000000e+00> : vector<8x256xf32>
    %88 = tpu.matmul %86, %87, %cst_49 {dimension_numbers = #tpu.dot_dimension_numbers<[1], [0], [0], [1], [0, 0, 1, 1], [], []>} : vector<8x128xbf16>, vector<128x256xbf16>, vector<8x256xf32> -> vector<8x256xf32>
    %c0_50 = arith.constant 0 : index
    %c0_51 = arith.constant 0 : index
    %89 = vector.load %arg12[%c0_50, %c0_51] : memref<1x256xf32, #tpu.memory_space<vmem>>, vector<1x256xf32>
    %90 = vector.broadcast %89 : vector<1x256xf32> to vector<8x256xf32>
    %91 = arith.addf %88, %90 : vector<8x256xf32>
    %c0_52 = arith.constant 0 : index
    %c0_53 = arith.constant 0 : index
    %92 = vector.load %arg15[%c0_52, %c0_53] : memref<8x256xf32, #tpu.memory_space<vmem>>, vector<8x256xf32>
    tpu.vector_store %arg15[%c0_52, %c0_53], %91 {strides = array<i32>} : memref<8x256xf32, #tpu.memory_space<vmem>>, vector<8x256xf32>,
    return
  }
}

</mosaic_0001>

<llo_original>
// kernel: sentiment_neuron_forward.1
$region0: #{sentiment_neuron_forward.1}
  #allocation0 [shape = 'u32[]', space=smem, size = 0x4, offset = 0x4, fixed_abs, tag = 'smem constant byte address 0x4 - core index']
  #allocation1 [shape = 'u32[144,128]{1,0:T(1,128)}', space=vmem, size = 0x12000, scoped, tag = 'internal scratch']
  %s0 = inlined_call_operand.vmem [shape: f32[8,64], index: 0, kind: input, shape index: {}]
  %s1 = inlined_call_operand.vmem [shape: f32[2,8,128], index: 1, kind: input, shape index: {}]
  %s2 = inlined_call_operand.vmem [shape: f32[2,8,128], index: 2, kind: input, shape index: {}]
  %s3 = inlined_call_operand.vmem [shape: bf16[64,640], index: 3, kind: input, shape index: {}]
  %s4 = inlined_call_operand.hbm [shape: bf16[128,128], index: 4, kind: input, shape index: {}]
  %s5 = inlined_call_operand.hbm [shape: bf16[128,512], index: 5, kind: input, shape index: {}]
  %s6 = inlined_call_operand.hbm [shape: f32[1,512], index: 6, kind: input, shape index: {}]
  %s7 = inlined_call_operand.vmem [shape: bf16[128,640], index: 7, kind: input, shape index: {}]
  %s8 = inlined_call_operand.hbm [shape: bf16[128,128], index: 8, kind: input, shape index: {}]
  %s9 = inlined_call_operand.hbm [shape: bf16[128,512], index: 9, kind: input, shape index: {}]
  %s10 = inlined_call_operand.hbm [shape: f32[1,512], index: 10, kind: input, shape index: {}]
  %s11 = inlined_call_operand.hbm [shape: bf16[128,256], index: 11, kind: input, shape index: {}]
  %s12 = inlined_call_operand.vmem [shape: f32[1,256], index: 12, kind: input, shape index: {}]
  %s13 = inlined_call_operand.hbm [shape: f32[2,8,128], index: 13, kind: output, shape index: {0}]
  %s14 = inlined_call_operand.hbm [shape: f32[2,8,128], index: 14, kind: output, shape index: {1}]
  %s15 = inlined_call_operand.hbm [shape: f32[8,256], index: 15, kind: output, shape index: {2}]
  %16 = xla_tuple %s13, %s14, %s15
  %s17 = sld [smem:[#allocation0]]
  $region106: #{sentiment_neuron_forward.1} parent=0
    _
  %s19 = ssub.s32 1, %s17
  %s20 = scalar_select 0, %s19, %s17
  $region1: #{sentiment_neuron_forward.1} parent=0
    #allocation2 [shape = 'u8[32768]{0}', space=vmem, size = 0x8000, scoped, tag = 'input window, operand 4, single buffered']
    #allocation3 [shape = 's32[1]{0}', space=sflag, size = 0x4, scoped, tag = 'scoped memory for sentiment_neuron_forward.1']
    #allocation4 [shape = 's32[1]{0}', space=sflag, size = 0x4, scoped, tag = 'scoped memory for sentiment_neuron_forward.1']
    #allocation5 [shape = 'u8[131072]{0}', space=vmem, size = 0x20000, scoped, tag = 'input window, operand 5, single buffered']
    #allocation6 [shape = 's32[1]{0}', space=sflag, size = 0x4, scoped, tag = 'scoped memory for sentiment_neuron_forward.1']
    #allocation7 [shape = 'u8[2048]{0}', space=vmem, size = 0x800, scoped, tag = 'input window, operand 6, single buffered']
    #allocation8 [shape = 'u8[32768]{0}', space=vmem, size = 0x8000, scoped, tag = 'input window, operand 8, single buffered']
    #allocation9 [shape = 's32[1]{0}', space=sflag, size = 0x4, scoped, tag = 'scoped memory for sentiment_neuron_forward.1']
    #allocation10 [shape = 'u8[131072]{0}', space=vmem, size = 0x20000, scoped, tag = 'input window, operand 9, single buffered']
    #allocation11 [shape = 'u8[2048]{0}', space=vmem, size = 0x800, scoped, tag = 'input window, operand 10, single buffered']
    #allocation12 [shape = 's32[1]{0}', space=sflag, size = 0x4, scoped, tag = 'scoped memory for sentiment_neuron_forward.1']
    #allocation13 [shape = 'u8[65536]{0}', space=vmem, size = 0x10000, scoped, tag = 'input window, operand 11, single buffered']
    #allocation14 [shape = 'u8[8192]{0}', space=vmem, size = 0x2000, scoped, tag = 'output window, operand 0, single buffered']
    #allocation15 [shape = 'u8[8192]{0}', space=vmem, size = 0x2000, scoped, tag = 'output window, operand 1, single buffered']
    #allocation16 [shape = 's32[1]{0}', space=sflag, size = 0x4, scoped, tag = 'scoped memory for sentiment_neuron_forward.1']
    #allocation17 [shape = 'u8[8192]{0}', space=vmem, size = 0x2000, scoped, tag = 'output window, operand 2, single buffered']
    %21 = vsyncpa [#allocation3], 0
    %22 = vsyncpa [#allocation6], 0
    %23 = vsyncpa [#allocation9], 0
    %24 = vsyncpa [#allocation12], 0
    %25 = vsyncpa [#allocation4], 0
    %26 = vsyncpa [#allocation16], 0
    // Predicated region
    $region2: #{sentiment_neuron_forward.1} parent=1 // pred_check
      _
    $region3: #{sentiment_neuron_forward.1} parent=1 // pred_check_branch
      %28 = sbr.rel (0) target = $region5
    $region4: #{sentiment_neuron_forward.1} parent=1 // pred_region
      _
    $region5: #{sentiment_neuron_forward.1} parent=1 // pred_fallthru
      _
    // Predicated region
    $region6: #{sentiment_neuron_forward.1} parent=1 // pred_check
      _
    $region7: #{sentiment_neuron_forward.1} parent=1 // pred_check_branch
      %30 = sbr.rel (0) target = $region9
    $region8: #{sentiment_neuron_forward.1} parent=1 // pred_region
      _
    $region9: #{sentiment_neuron_forward.1} parent=1 // pred_fallthru
      _
    // Predicated region
    $region10: #{sentiment_neuron_forward.1} parent=1 // pred_check
      _
    $region11: #{sentiment_neuron_forward.1} parent=1 // pred_check_branch
      %32 = sbr.rel (0) target = $region13
    $region12: #{sentiment_neuron_forward.1} parent=1 // pred_region
      _
    $region13: #{sentiment_neuron_forward.1} parent=1 // pred_fallthru
      _
    // Predicated region
    $region14: #{sentiment_neuron_forward.1} parent=1 // pred_check
      _
    $region15: #{sentiment_neuron_forward.1} parent=1 // pred_check_branch
      %34 = sbr.rel (0) target = $region17
    $region16: #{sentiment_neuron_forward.1} parent=1 // pred_region
      _
    $region17: #{sentiment_neuron_forward.1} parent=1 // pred_fallthru
      _
    // Predicated region
    $region18: #{sentiment_neuron_forward.1} parent=1 // pred_check
      _
    $region19: #{sentiment_neuron_forward.1} parent=1 // pred_check_branch
      %36 = sbr.rel (0) target = $region21
    $region20: #{sentiment_neuron_forward.1} parent=1 // pred_region
      %s38 = ssub.s32 1024, 1024
      %39 = vsyncadd [#allocation3], %s38
      %s40 = sshll.u32 [#allocation2], 4
      %s41 = int_to_ptr.vmem [resolvable:$true] %s40
      %46 = dma.hbm_to_vmem [thread:$0]  %s4, 1024, %s41, [#allocation3], 64, 64, 4
    $region21: #{sentiment_neuron_forward.1} parent=1 // pred_fallthru
      _
    // Predicated region
    $region22: #{sentiment_neuron_forward.1} parent=1 // pred_check
      _
    $region23: #{sentiment_neuron_forward.1} parent=1 // pred_check_branch
      %48 = sbr.rel (0) target = $region25
    $region24: #{sentiment_neuron_forward.1} parent=1 // pred_region
      %s50 = ssub.s32 4096, 4096
      %51 = vsyncadd [#allocation6], %s50
      %s52 = sshll.u32 [#allocation5], 4
      %s53 = int_to_ptr.vmem [resolvable:$true] %s52
      %58 = dma.hbm_to_vmem [thread:$0]  %s5, 4096, %s53, [#allocation6], 256, 256, 16
    $region25: #{sentiment_neuron_forward.1} parent=1 // pred_fallthru
      _
    // Predicated region
    $region26: #{sentiment_neuron_forward.1} parent=1 // pred_check
      _
    $region27: #{sentiment_neuron_forward.1} parent=1 // pred_check_branch
      %60 = sbr.rel (0) target = $region29
    $region28: #{sentiment_neuron_forward.1} parent=1 // pred_region
      %s62 = ssub.s32 64, 64
      %63 = vsyncadd [#allocation6], %s62
      %s65 = sshll.u32 [#allocation7], 4
      %s66 = int_to_ptr.vmem [resolvable:$true] %s65
      %68 = dma.hbm_to_vmem [thread:$0]  %s6, 64, %s66, [#allocation6]
    $region29: #{sentiment_neuron_forward.1} parent=1 // pred_fallthru
      _
    // Predicated region
    $region30: #{sentiment_neuron_forward.1} parent=1 // pred_check
      _
    $region31: #{sentiment_neuron_forward.1} parent=1 // pred_check_branch
      %70 = sbr.rel (0) target = $region33
    $region32: #{sentiment_neuron_forward.1} parent=1 // pred_region
      _
    $region33: #{sentiment_neuron_forward.1} parent=1 // pred_fallthru
      _
    // Predicated region
    $region34: #{sentiment_neuron_forward.1} parent=1 // pred_check
      _
    $region35: #{sentiment_neuron_forward.1} parent=1 // pred_check_branch
      %72 = sbr.rel (0) target = $region37
    $region36: #{sentiment_neuron_forward.1} parent=1 // pred_region
      %s74 = ssub.s32 1024, 1024
      %75 = vsyncadd [#allocation9], %s74
      %s76 = sshll.u32 [#allocation8], 4
      %s77 = int_to_ptr.vmem [resolvable:$true] %s76
      %82 = dma.hbm_to_vmem [thread:$0]  %s8, 1024, %s77, [#allocation9], 64, 64, 4
    $region37: #{sentiment_neuron_forward.1} parent=1 // pred_fallthru
      _
    // Predicated region
    $region38: #{sentiment_neuron_forward.1} parent=1 // pred_check
      _
    $region39: #{sentiment_neuron_forward.1} parent=1 // pred_check_branch
      %84 = sbr.rel (0) target = $region41
    $region40: #{sentiment_neuron_forward.1} parent=1 // pred_region
      %s86 = ssub.s32 4096, 4096
      %87 = vsyncadd [#allocation9], %s86
      %s88 = sshll.u32 [#allocation10], 4
      %s89 = int_to_ptr.vmem [resolvable:$true] %s88
      %94 = dma.hbm_to_vmem [thread:$0]  %s9, 4096, %s89, [#allocation9], 256, 256, 16
    $region41: #{sentiment_neuron_forward.1} parent=1 // pred_fallthru
      _
    // Predicated region
    $region42: #{sentiment_neuron_forward.1} parent=1 // pred_check
      _
    $region43: #{sentiment_neuron_forward.1} parent=1 // pred_check_branch
      %96 = sbr.rel (0) target = $region45
    $region44: #{sentiment_neuron_forward.1} parent=1 // pred_region
      %s98 = ssub.s32 64, 64
      %99 = vsyncadd [#allocation12], %s98
      %s101 = sshll.u32 [#allocation11], 4
      %s102 = int_to_ptr.vmem [resolvable:$true] %s101
      %104 = dma.hbm_to_vmem [thread:$0]  %s10, 64, %s102, [#allocation12]
    $region45: #{sentiment_neuron_forward.1} parent=1 // pred_fallthru
      _
    // Predicated region
    $region46: #{sentiment_neuron_forward.1} parent=1 // pred_check
      _
    $region47: #{sentiment_neuron_forward.1} parent=1 // pred_check_branch
      %106 = sbr.rel (0) target = $region49
    $region48: #{sentiment_neuron_forward.1} parent=1 // pred_region
      %s108 = ssub.s32 2048, 2048
      %109 = vsyncadd [#allocation12], %s108
      %s110 = sshll.u32 [#allocation13], 4
      %s111 = int_to_ptr.vmem [resolvable:$true] %s110
      %116 = dma.hbm_to_vmem [thread:$0]  %s11, 2048, %s111, [#allocation12], 128, 128, 8
    $region49: #{sentiment_neuron_forward.1} parent=1 // pred_fallthru
      _
    // Predicated region
    $region50: #{sentiment_neuron_forward.1} parent=1 // pred_check
      _
    $region51: #{sentiment_neuron_forward.1} parent=1 // pred_check_branch
      %118 = sbr.rel (0) target = $region53
    $region52: #{sentiment_neuron_forward.1} parent=1 // pred_region
      _
    $region53: #{sentiment_neuron_forward.1} parent=1 // pred_fallthru
      _
    // Predicated region
    $region54: #{sentiment_neuron_forward.1} parent=1 // pred_check
      _
    $region55: #{sentiment_neuron_forward.1} parent=1 // pred_check_branch
      %120 = sbr.rel (0) target = $region57
    $region56: #{sentiment_neuron_forward.1} parent=1 // pred_region
      %121 = dma.done [#allocation3], 1024
    $region57: #{sentiment_neuron_forward.1} parent=1 // pred_fallthru
      _
    // Predicated region
    $region58: #{sentiment_neuron_forward.1} parent=1 // pred_check
      _
    $region59: #{sentiment_neuron_forward.1} parent=1 // pred_check_branch
      %123 = sbr.rel (0) target = $region61
    $region60: #{sentiment_neuron_forward.1} parent=1 // pred_region
      %124 = dma.done [#allocation6], 4096
    $region61: #{sentiment_neuron_forward.1} parent=1 // pred_fallthru
      _
    // Predicated region
    $region62: #{sentiment_neuron_forward.1} parent=1 // pred_check
      _
    $region63: #{sentiment_neuron_forward.1} parent=1 // pred_check_branch
      %126 = sbr.rel (0) target = $region65
    $region64: #{sentiment_neuron_forward.1} parent=1 // pred_region
      %127 = dma.done [#allocation6], 64
    $region65: #{sentiment_neuron_forward.1} parent=1 // pred_fallthru
      _
    // Predicated region
    $region66: #{sentiment_neuron_forward.1} parent=1 // pred_check
      _
    $region67: #{sentiment_neuron_forward.1} parent=1 // pred_check_branch
      %129 = sbr.rel (0) target = $region69
    $region68: #{sentiment_neuron_forward.1} parent=1 // pred_region
      %130 = dma.done [#allocation9], 1024
    $region69: #{sentiment_neuron_forward.1} parent=1 // pred_fallthru
      _
    // Predicated region
    $region70: #{sentiment_neuron_forward.1} parent=1 // pred_check
      _
    $region71: #{sentiment_neuron_forward.1} parent=1 // pred_check_branch
      %132 = sbr.rel (0) target = $region73
    $region72: #{sentiment_neuron_forward.1} parent=1 // pred_region
      %133 = dma.done [#allocation9], 4096
    $region73: #{sentiment_neuron_forward.1} parent=1 // pred_fallthru
      _
    // Predicated region
    $region74: #{sentiment_neuron_forward.1} parent=1 // pred_check
      _
    $region75: #{sentiment_neuron_forward.1} parent=1 // pred_check_branch
      %135 = sbr.rel (0) target = $region77
    $region76: #{sentiment_neuron_forward.1} parent=1 // pred_region
      %136 = dma.done [#allocation12], 64
    $region77: #{sentiment_neuron_forward.1} parent=1 // pred_fallthru
      _
    // Predicated region
    $region78: #{sentiment_neuron_forward.1} parent=1 // pred_check
      _
    $region79: #{sentiment_neuron_forward.1} parent=1 // pred_check_branch
      %138 = sbr.rel (0) target = $region81
    $region80: #{sentiment_neuron_forward.1} parent=1 // pred_region
      %139 = dma.done [#allocation12], 2048
    $region81: #{sentiment_neuron_forward.1} parent=1 // pred_fallthru
      _
    %v141 = vld [vmem:[%s0] sm:$0xff]
    %v142 = vld [vmem:[%s1] sm:$0xff]
    %v143 = vld [vmem:[%s2] sm:$0xff]
    %v144 = vpack.c.bf16 %v141, %v141
    %v145 = vld [vmem:[%s3] sm:$0xff]
    %v146 = vld [vmem:[%s3 + $0x8] sm:$0xff]
    %v147 = vld [vmem:[%s3 + $0x10] sm:$0xf]
    %v148 = vld [vmem:[%s3 + $0x14] sm:$0xff]
    %v149 = vld [vmem:[%s3 + $0x1c] sm:$0xff]
    %v150 = vld [vmem:[%s3 + $0x24] sm:$0xf]
    %v151 = vld [vmem:[%s3 + $0x28] sm:$0xff]
    %v152 = vld [vmem:[%s3 + $0x30] sm:$0xff]
    %v153 = vld [vmem:[%s3 + $0x38] sm:$0xf]
    %v154 = vld [vmem:[%s3 + $0x3c] sm:$0xff]
    %v155 = vld [vmem:[%s3 + $0x44] sm:$0xff]
    %v156 = vld [vmem:[%s3 + $0x4c] sm:$0xf]
    %v157 = vld [vmem:[%s3 + $0x50] sm:$0xff]
    %v158 = vld [vmem:[%s3 + $0x58] sm:$0xff]
    %v159 = vld [vmem:[%s3 + $0x60] sm:$0xf]
    %v160 = vld [vmem:[%s3 + $0x64] sm:$0xff]
    %v161 = vld [vmem:[%s3 + $0x6c] sm:$0xff]
    %v162 = vld [vmem:[%s3 + $0x74] sm:$0xf]
    %v163 = vld [vmem:[%s3 + $0x78] sm:$0xff]
    %v164 = vld [vmem:[%s3 + $0x80] sm:$0xff]
    %v165 = vld [vmem:[%s3 + $0x88] sm:$0xf]
    %v166 = vld [vmem:[%s3 + $0x8c] sm:$0xff]
    %v167 = vld [vmem:[%s3 + $0x94] sm:$0xff]
    %v168 = vld [vmem:[%s3 + $0x9c] sm:$0xf]
    %v193 = vunpack.c.l.b16 %v145
    %v194 = vunpack.c.h.b16 %v145
    %v195 = vunpack.c.l.b16 %v146
    %v196 = vunpack.c.h.b16 %v146
    %v197 = vunpack.c.l.b16 %v147
    %v198 = vunpack.c.l.b16 %v148
    %v199 = vunpack.c.h.b16 %v148
    %v200 = vunpack.c.l.b16 %v149
    %v201 = vunpack.c.h.b16 %v149
    %v202 = vunpack.c.l.b16 %v150
    %v203 = vunpack.c.l.b16 %v151
    %v204 = vunpack.c.h.b16 %v151
    %v205 = vunpack.c.l.b16 %v152
    %v206 = vunpack.c.h.b16 %v152
    %v207 = vunpack.c.l.b16 %v153
    %v208 = vunpack.c.l.b16 %v154
    %v209 = vunpack.c.h.b16 %v154
    %v210 = vunpack.c.l.b16 %v155
    %v211 = vunpack.c.h.b16 %v155
    %v212 = vunpack.c.l.b16 %v156
    %v213 = vunpack.c.l.b16 %v157
    %v214 = vunpack.c.h.b16 %v157
    %v215 = vunpack.c.l.b16 %v158
    %v216 = vunpack.c.h.b16 %v158
    %v217 = vunpack.c.l.b16 %v159
    %v218 = vunpack.c.l.b16 %v160
    %v219 = vunpack.c.h.b16 %v160
    %v220 = vunpack.c.l.b16 %v161
    %v221 = vunpack.c.h.b16 %v161
    %v222 = vunpack.c.l.b16 %v162
    %v223 = vunpack.c.l.b16 %v163
    %v224 = vunpack.c.h.b16 %v163
    %v225 = vunpack.c.l.b16 %v164
    %v226 = vunpack.c.h.b16 %v164
    %v227 = vunpack.c.l.b16 %v165
    %v228 = vunpack.c.l.b16 %v166
    %v229 = vunpack.c.h.b16 %v166
    %v230 = vunpack.c.l.b16 %v167
    %v231 = vunpack.c.h.b16 %v167
    %v232 = vunpack.c.l.b16 %v168
    %v233 = vpack.c.b16 %v198, %v193
    %v234 = vpack.c.b16 %v199, %v194
    %v235 = vpack.c.b16 %v200, %v195
    %v236 = vpack.c.b16 %v201, %v196
    %v237 = vpack.c.b16 %v202, %v197
    %v238 = vpack.c.b16 %v208, %v203
    %v239 = vpack.c.b16 %v209, %v204
    %v240 = vpack.c.b16 %v210, %v205
    %v241 = vpack.c.b16 %v211, %v206
    %v242 = vpack.c.b16 %v212, %v207
    %v243 = vpack.c.b16 %v218, %v213
    %v244 = vpack.c.b16 %v219, %v214
    %v245 = vpack.c.b16 %v220, %v215
    %v246 = vpack.c.b16 %v221, %v216
    %v247 = vpack.c.b16 %v222, %v217
    %v248 = vpack.c.b16 %v228, %v223
    %v249 = vpack.c.b16 %v229, %v224
    %v250 = vpack.c.b16 %v230, %v225
    %v251 = vpack.c.b16 %v231, %v226
    %v252 = vpack.c.b16 %v232, %v227
    %vm273 = vcmask 523264
    %v275 = vsel %vm273, %v144, 0
    %277 = vmatprep.subr.bf16.mxu0 %v234
    %278 = vmatpush1.bf16.msra.mxu0 %v233
    %279 = vmatprep.subr.bf16.mxu0 %v239
    %280 = vmatpush1.bf16.msra.mxu0 %v238
    %281 = vmatprep.subr.bf16.mxu0 %v244
    %282 = vmatpush1.bf16.msra.mxu0 %v243
    %283 = vmatprep.subr.bf16.mxu0 %v249
    %284 = vmatpush1.bf16.msra.mxu0 %v248
    %285 = vmatprep.subr.bf16.mxu0 0
    %286 = vmatpush1.bf16.msra.mxu0 0
    %287 = vmatprep.subr.bf16.mxu0 0
    %288 = vmatpush1.bf16.msra.mxu0 0
    %289 = vmatprep.subr.bf16.mxu0 0
    %290 = vmatpush1.bf16.msra.mxu0 0
    %291 = vmatprep.subr.bf16.mxu0 0
    %292 = vmatpush1.bf16.msra.mxu0 0
    %293 = vmatprep.subr.bf16.mxu0 0
    %294 = vmatpush1.bf16.msra.mxu0 0
    %295 = vmatprep.subr.bf16.mxu0 0
    %296 = vmatpush1.bf16.msra.mxu0 0
    %297 = vmatprep.subr.bf16.mxu0 0
    %298 = vmatpush1.bf16.msra.mxu0 0
    %299 = vmatprep.subr.bf16.mxu0 0
    %300 = vmatpush1.bf16.msra.mxu0 0
    %301 = vmatprep.subr.bf16.mxu0 0
    %302 = vmatpush1.bf16.msra.mxu0 0
    %303 = vmatprep.subr.bf16.mxu0 0
    %304 = vmatpush1.bf16.msra.mxu0 0
    %305 = vmatprep.subr.bf16.mxu0 0
    %306 = vmatpush1.bf16.msra.mxu0 0
    %307 = vmatprep.subr.bf16.mxu0 0
    %308 = vmatpush1.bf16.msra.mxu0 0
    %309 = vmatprep.mubr.bf16.mxu0 0
    %310 = vmatmul.mubr.bf16.gmra.mrb[0].mxu0 %v275
    %v311 = vpop.f32.mrb[0].mxu0
    %v312 = vadd.f32 0.0, %v311
    %v313 = vpop.f32.mrb[0].mxu0
    %v314 = vadd.f32 0.0, %v313
    %v315 = vpop.f32.mrb[0].mxu0
    %v316 = vpop.f32.mrb[0].mxu0
    %317 = vdwg.mxu0
    %318 = vmatprep.subr.bf16.mxu0 %v236
    %319 = vmatpush1.bf16.msra.mxu0 %v235
    %320 = vmatprep.subr.bf16.mxu0 %v241
    %321 = vmatpush1.bf16.msra.mxu0 %v240
    %322 = vmatprep.subr.bf16.mxu0 %v246
    %323 = vmatpush1.bf16.msra.mxu0 %v245
    %324 = vmatprep.subr.bf16.mxu0 %v251
    %325 = vmatpush1.bf16.msra.mxu0 %v250
    %326 = vmatprep.subr.bf16.mxu0 0
    %327 = vmatpush1.bf16.msra.mxu0 0
    %328 = vmatprep.subr.bf16.mxu0 0
    %329 = vmatpush1.bf16.msra.mxu0 0
    %330 = vmatprep.subr.bf16.mxu0 0
    %331 = vmatpush1.bf16.msra.mxu0 0
    %332 = vmatprep.subr.bf16.mxu0 0
    %333 = vmatpush1.bf16.msra.mxu0 0
    %334 = vmatprep.subr.bf16.mxu0 0
    %335 = vmatpush1.bf16.msra.mxu0 0
    %336 = vmatprep.subr.bf16.mxu0 0
    %337 = vmatpush1.bf16.msra.mxu0 0
    %338 = vmatprep.subr.bf16.mxu0 0
    %339 = vmatpush1.bf16.msra.mxu0 0
    %340 = vmatprep.subr.bf16.mxu0 0
    %341 = vmatpush1.bf16.msra.mxu0 0
    %342 = vmatprep.subr.bf16.mxu0 0
    %343 = vmatpush1.bf16.msra.mxu0 0
    %344 = vmatprep.subr.bf16.mxu0 0
    %345 = vmatpush1.bf16.msra.mxu0 0
    %346 = vmatprep.subr.bf16.mxu0 0
    %347 = vmatpush1.bf16.msra.mxu0 0
    %348 = vmatprep.subr.bf16.mxu0 0
    %349 = vmatpush1.bf16.msra.mxu0 0
    %350 = vmatprep.mubr.bf16.mxu0 0
    %351 = vmatmul.mubr.bf16.gmra.mrb[0].mxu0 %v275
    %v352 = vpop.f32.mrb[0].mxu0
    %v353 = vadd.f32 0.0, %v352
    %v354 = vpop.f32.mrb[0].mxu0
    %v355 = vadd.f32 0.0, %v354
    %v356 = vpop.f32.mrb[0].mxu0
    %v357 = vpop.f32.mrb[0].mxu0
    %358 = vdwg.mxu0
    %359 = vmatprep.subr.bf16.mxu0 0
    %360 = vmatpush1.bf16.msra.mxu0 %v237
    %361 = vmatprep.subr.bf16.mxu0 0
    %362 = vmatpush1.bf16.msra.mxu0 %v242
    %363 = vmatprep.subr.bf16.mxu0 0
    %364 = vmatpush1.bf16.msra.mxu0 %v247
    %365 = vmatprep.subr.bf16.mxu0 0
    %366 = vmatpush1.bf16.msra.mxu0 %v252
    %367 = vmatprep.subr.bf16.mxu0 0
    %368 = vmatpush1.bf16.msra.mxu0 0
    %369 = vmatprep.subr.bf16.mxu0 0
    %370 = vmatpush1.bf16.msra.mxu0 0
    %371 = vmatprep.subr.bf16.mxu0 0
    %372 = vmatpush1.bf16.msra.mxu0 0
    %373 = vmatprep.subr.bf16.mxu0 0
    %374 = vmatpush1.bf16.msra.mxu0 0
    %375 = vmatprep.subr.bf16.mxu0 0
    %376 = vmatpush1.bf16.msra.mxu0 0
    %377 = vmatprep.subr.bf16.mxu0 0
    %378 = vmatpush1.bf16.msra.mxu0 0
    %379 = vmatprep.subr.bf16.mxu0 0
    %380 = vmatpush1.bf16.msra.mxu0 0
    %381 = vmatprep.subr.bf16.mxu0 0
    %382 = vmatpush1.bf16.msra.mxu0 0
    %383 = vmatprep.subr.bf16.mxu0 0
    %384 = vmatpush1.bf16.msra.mxu0 0
    %385 = vmatprep.subr.bf16.mxu0 0
    %386 = vmatpush1.bf16.msra.mxu0 0
    %387 = vmatprep.subr.bf16.mxu0 0
    %388 = vmatpush1.bf16.msra.mxu0 0
    %389 = vmatprep.subr.bf16.mxu0 0
    %390 = vmatpush1.bf16.msra.mxu0 0
    %391 = vmatprep.mubr.bf16.mxu0 0
    %392 = vmatmul.mubr.bf16.gmra.mrb[0].mxu0 %v275
    %v393 = vpop.f32.mrb[0].mxu0
    %v394 = vadd.f32 0.0, %v393
    %v395 = vpop.f32.mrb[0].mxu0
    %v396 = vpop.f32.mrb[0].mxu0
    %v397 = vpop.f32.mrb[0].mxu0
    %398 = vdwg.mxu0
    %v399 = vpack.c.bf16 %v142, %v142
    %v400 = vld [vmem:[#allocation2] sm:$0xf]
    %v401 = vld [vmem:[#allocation2 + $0x4] sm:$0xf]
    %v402 = vld [vmem:[#allocation2 + $0x8] sm:$0xf]
    %v403 = vld [vmem:[#allocation2 + $0xc] sm:$0xf]
    %v404 = vld [vmem:[#allocation2 + $0x10] sm:$0xf]
    %v405 = vld [vmem:[#allocation2 + $0x14] sm:$0xf]
    %v406 = vld [vmem:[#allocation2 + $0x18] sm:$0xf]
    %v407 = vld [vmem:[#allocation2 + $0x1c] sm:$0xf]
    %v408 = vld [vmem:[#allocation2 + $0x20] sm:$0xf]
    %v409 = vld [vmem:[#allocation2 + $0x24] sm:$0xf]
    %v410 = vld [vmem:[#allocation2 + $0x28] sm:$0xf]
    %v411 = vld [vmem:[#allocation2 + $0x2c] sm:$0xf]
    %v412 = vld [vmem:[#allocation2 + $0x30] sm:$0xf]
    %v413 = vld [vmem:[#allocation2 + $0x34] sm:$0xf]
    %v414 = vld [vmem:[#allocation2 + $0x38] sm:$0xf]
    %v415 = vld [vmem:[#allocation2 + $0x3c] sm:$0xf]
    %v432 = vunpack.c.l.b16 %v400
    %v433 = vunpack.c.l.b16 %v401
    %v434 = vunpack.c.l.b16 %v402
    %v435 = vunpack.c.l.b16 %v403
    %v436 = vunpack.c.l.b16 %v404
    %v437 = vunpack.c.l.b16 %v405
    %v438 = vunpack.c.l.b16 %v406
    %v439 = vunpack.c.l.b16 %v407
    %v440 = vunpack.c.l.b16 %v408
    %v441 = vunpack.c.l.b16 %v409
    %v442 = vunpack.c.l.b16 %v410
    %v443 = vunpack.c.l.b16 %v411
    %v444 = vunpack.c.l.b16 %v412
    %v445 = vunpack.c.l.b16 %v413
    %v446 = vunpack.c.l.b16 %v414
    %v447 = vunpack.c.l.b16 %v415
    %v448 = vpack.c.b16 %v433, %v432
    %v449 = vpack.c.b16 %v435, %v434
    %v450 = vpack.c.b16 %v437, %v436
    %v451 = vpack.c.b16 %v439, %v438
    %v452 = vpack.c.b16 %v441, %v440
    %v453 = vpack.c.b16 %v443, %v442
    %v454 = vpack.c.b16 %v445, %v444
    %v455 = vpack.c.b16 %v447, %v446
    %464 = vmatprep.subr.bf16.mxu0 0
    %465 = vmatpush1.bf16.msra.mxu0 %v448
    %466 = vmatprep.subr.bf16.mxu0 0
    %467 = vmatpush1.bf16.msra.mxu0 %v449
    %468 = vmatprep.subr.bf16.mxu0 0
    %469 = vmatpush1.bf16.msra.mxu0 %v450
    %470 = vmatprep.subr.bf16.mxu0 0
    %471 = vmatpush1.bf16.msra.mxu0 %v451
    %472 = vmatprep.subr.bf16.mxu0 0
    %473 = vmatpush1.bf16.msra.mxu0 %v452
    %474 = vmatprep.subr.bf16.mxu0 0
    %475 = vmatpush1.bf16.msra.mxu0 %v453
    %476 = vmatprep.subr.bf16.mxu0 0
    %477 = vmatpush1.bf16.msra.mxu0 %v454
    %478 = vmatprep.subr.bf16.mxu0 0
    %479 = vmatpush1.bf16.msra.mxu0 %v455
    %480 = vmatprep.subr.bf16.mxu0 0
    %481 = vmatpush1.bf16.msra.mxu0 0
    %482 = vmatprep.subr.bf16.mxu0 0
    %483 = vmatpush1.bf16.msra.mxu0 0
    %484 = vmatprep.subr.bf16.mxu0 0
    %485 = vmatpush1.bf16.msra.mxu0 0
    %486 = vmatprep.subr.bf16.mxu0 0
    %487 = vmatpush1.bf16.msra.mxu0 0
    %488 = vmatprep.subr.bf16.mxu0 0
    %489 = vmatpush1.bf16.msra.mxu0 0
    %490 = vmatprep.subr.bf16.mxu0 0
    %491 = vmatpush1.bf16.msra.mxu0 0
    %492 = vmatprep.subr.bf16.mxu0 0
    %493 = vmatpush1.bf16.msra.mxu0 0
    %494 = vmatprep.subr.bf16.mxu0 0
    %495 = vmatpush1.bf16.msra.mxu0 0
    %496 = vmatprep.mubr.bf16.mxu0 0
    %497 = vmatmul.mubr.bf16.gmra.mrb[0].mxu0 %v399
    %v498 = vpop.f32.mrb[0].mxu0
    %v499 = vadd.f32 0.0, %v498
    %v500 = vpop.f32.mrb[0].mxu0
    %v501 = vpop.f32.mrb[0].mxu0
    %v502 = vpop.f32.mrb[0].mxu0
    %503 = vdwg.mxu0
    %v504 = vmul.f32 %v312, %v499
    %v505 = vpack.c.bf16 %v504, %v504
    %v506 = vld [vmem:[#allocation5] sm:$0xff]
    %v507 = vld [vmem:[#allocation5 + $0x8] sm:$0xff]
    %v508 = vld [vmem:[#allocation5 + $0x10] sm:$0xff]
    %v509 = vld [vmem:[#allocation5 + $0x18] sm:$0xff]
    %v510 = vld [vmem:[#allocation5 + $0x20] sm:$0xff]
    %v511 = vld [vmem:[#allocation5 + $0x28] sm:$0xff]
    %v512 = vld [vmem:[#allocation5 + $0x30] sm:$0xff]
    %v513 = vld [vmem:[#allocation5 + $0x38] sm:$0xff]
    %v514 = vld [vmem:[#allocation5 + $0x40] sm:$0xff]
    %v515 = vld [vmem:[#allocation5 + $0x48] sm:$0xff]
    %v516 = vld [vmem:[#allocation5 + $0x50] sm:$0xff]
    %v517 = vld [vmem:[#allocation5 + $0x58] sm:$0xff]
    %v518 = vld [vmem:[#allocation5 + $0x60] sm:$0xff]
    %v519 = vld [vmem:[#allocation5 + $0x68] sm:$0xff]
    %v520 = vld [vmem:[#allocation5 + $0x70] sm:$0xff]
    %v521 = vld [vmem:[#allocation5 + $0x78] sm:$0xff]
    %v522 = vld [vmem:[#allocation5 + $0x80] sm:$0xff]
    %v523 = vld [vmem:[#allocation5 + $0x88] sm:$0xff]
    %v524 = vld [vmem:[#allocation5 + $0x90] sm:$0xff]
    %v525 = vld [vmem:[#allocation5 + $0x98] sm:$0xff]
    %v526 = vld [vmem:[#allocation5 + $0xa0] sm:$0xff]
    %v527 = vld [vmem:[#allocation5 + $0xa8] sm:$0xff]
    %v528 = vld [vmem:[#allocation5 + $0xb0] sm:$0xff]
    %v529 = vld [vmem:[#allocation5 + $0xb8] sm:$0xff]
    %v530 = vld [vmem:[#allocation5 + $0xc0] sm:$0xff]
    %v531 = vld [vmem:[#allocation5 + $0xc8] sm:$0xff]
    %v532 = vld [vmem:[#allocation5 + $0xd0] sm:$0xff]
    %v533 = vld [vmem:[#allocation5 + $0xd8] sm:$0xff]
    %v534 = vld [vmem:[#allocation5 + $0xe0] sm:$0xff]
    %v535 = vld [vmem:[#allocation5 + $0xe8] sm:$0xff]
    %v536 = vld [vmem:[#allocation5 + $0xf0] sm:$0xff]
    %v537 = vld [vmem:[#allocation5 + $0xf8] sm:$0xff]
    %v570 = vunpack.c.l.b16 %v506
    %v571 = vunpack.c.h.b16 %v506
    %v572 = vunpack.c.l.b16 %v507
    %v573 = vunpack.c.h.b16 %v507
    %v574 = vunpack.c.l.b16 %v508
    %v575 = vunpack.c.h.b16 %v508
    %v576 = vunpack.c.l.b16 %v509
    %v577 = vunpack.c.h.b16 %v509
    %v578 = vunpack.c.l.b16 %v510
    %v579 = vunpack.c.h.b16 %v510
    %v580 = vunpack.c.l.b16 %v511
    %v581 = vunpack.c.h.b16 %v511
    %v582 = vunpack.c.l.b16 %v512
    %v583 = vunpack.c.h.b16 %v512
    %v584 = vunpack.c.l.b16 %v513
    %v585 = vunpack.c.h.b16 %v513
    %v586 = vunpack.c.l.b16 %v514
    %v587 = vunpack.c.h.b16 %v514
    %v588 = vunpack.c.l.b16 %v515
    %v589 = vunpack.c.h.b16 %v515
    %v590 = vunpack.c.l.b16 %v516
    %v591 = vunpack.c.h.b16 %v516
    %v592 = vunpack.c.l.b16 %v517
    %v593 = vunpack.c.h.b16 %v517
    %v594 = vunpack.c.l.b16 %v518
    %v595 = vunpack.c.h.b16 %v518
    %v596 = vunpack.c.l.b16 %v519
    %v597 = vunpack.c.h.b16 %v519
    %v598 = vunpack.c.l.b16 %v520
    %v599 = vunpack.c.h.b16 %v520
    %v600 = vunpack.c.l.b16 %v521
    %v601 = vunpack.c.h.b16 %v521
    %v602 = vunpack.c.l.b16 %v522
    %v603 = vunpack.c.h.b16 %v522
    %v604 = vunpack.c.l.b16 %v523
    %v605 = vunpack.c.h.b16 %v523
    %v606 = vunpack.c.l.b16 %v524
    %v607 = vunpack.c.h.b16 %v524
    %v608 = vunpack.c.l.b16 %v525
    %v609 = vunpack.c.h.b16 %v525
    %v610 = vunpack.c.l.b16 %v526
    %v611 = vunpack.c.h.b16 %v526
    %v612 = vunpack.c.l.b16 %v527
    %v613 = vunpack.c.h.b16 %v527
    %v614 = vunpack.c.l.b16 %v528
    %v615 = vunpack.c.h.b16 %v528
    %v616 = vunpack.c.l.b16 %v529
    %v617 = vunpack.c.h.b16 %v529
    %v618 = vunpack.c.l.b16 %v530
    %v619 = vunpack.c.h.b16 %v530
    %v620 = vunpack.c.l.b16 %v531
    %v621 = vunpack.c.h.b16 %v531
    %v622 = vunpack.c.l.b16 %v532
    %v623 = vunpack.c.h.b16 %v532
    %v624 = vunpack.c.l.b16 %v533
    %v625 = vunpack.c.h.b16 %v533
    %v626 = vunpack.c.l.b16 %v534
    %v627 = vunpack.c.h.b16 %v534
    %v628 = vunpack.c.l.b16 %v535
    %v629 = vunpack.c.h.b16 %v535
    %v630 = vunpack.c.l.b16 %v536
    %v631 = vunpack.c.h.b16 %v536
    %v632 = vunpack.c.l.b16 %v537
    %v633 = vunpack.c.h.b16 %v537
    %v634 = vpack.c.b16 %v574, %v570
    %v635 = vpack.c.b16 %v575, %v571
    %v636 = vpack.c.b16 %v576, %v572
    %v637 = vpack.c.b16 %v577, %v573
    %v638 = vpack.c.b16 %v582, %v578
    %v639 = vpack.c.b16 %v583, %v579
    %v640 = vpack.c.b16 %v584, %v580
    %v641 = vpack.c.b16 %v585, %v581
    %v642 = vpack.c.b16 %v590, %v586
    %v643 = vpack.c.b16 %v591, %v587
    %v644 = vpack.c.b16 %v592, %v588
    %v645 = vpack.c.b16 %v593, %v589
    %v646 = vpack.c.b16 %v598, %v594
    %v647 = vpack.c.b16 %v599, %v595
    %v648 = vpack.c.b16 %v600, %v596
    %v649 = vpack.c.b16 %v601, %v597
    %v650 = vpack.c.b16 %v606, %v602
    %v651 = vpack.c.b16 %v607, %v603
    %v652 = vpack.c.b16 %v608, %v604
    %v653 = vpack.c.b16 %v609, %v605
    %v654 = vpack.c.b16 %v614, %v610
    %v655 = vpack.c.b16 %v615, %v611
    %v656 = vpack.c.b16 %v616, %v612
    %v657 = vpack.c.b16 %v617, %v613
    %v658 = vpack.c.b16 %v622, %v618
    %v659 = vpack.c.b16 %v623, %v619
    %v660 = vpack.c.b16 %v624, %v620
    %v661 = vpack.c.b16 %v625, %v621
    %v662 = vpack.c.b16 %v630, %v626
    %v663 = vpack.c.b16 %v631, %v627
    %v664 = vpack.c.b16 %v632, %v628
    %v665 = vpack.c.b16 %v633, %v629
    %698 = vmatprep.subr.bf16.mxu0 %v635
    %699 = vmatpush1.bf16.msra.mxu0 %v634
    %700 = vmatprep.subr.bf16.mxu0 %v639
    %701 = vmatpush1.bf16.msra.mxu0 %v638
    %702 = vmatprep.subr.bf16.mxu0 %v643
    %703 = vmatpush1.bf16.msra.mxu0 %v642
    %704 = vmatprep.subr.bf16.mxu0 %v647
    %705 = vmatpush1.bf16.msra.mxu0 %v646
    %706 = vmatprep.subr.bf16.mxu0 %v651
    %707 = vmatpush1.bf16.msra.mxu0 %v650
    %708 = vmatprep.subr.bf16.mxu0 %v655
    %709 = vmatpush1.bf16.msra.mxu0 %v654
    %710 = vmatprep.subr.bf16.mxu0 %v659
    %711 = vmatpush1.bf16.msra.mxu0 %v658
    %712 = vmatprep.subr.bf16.mxu0 %v663
    %713 = vmatpush1.bf16.msra.mxu0 %v662
    %714 = vmatprep.subr.bf16.mxu0 0
    %715 = vmatpush1.bf16.msra.mxu0 0
    %716 = vmatprep.subr.bf16.mxu0 0
    %717 = vmatpush1.bf16.msra.mxu0 0
    %718 = vmatprep.subr.bf16.mxu0 0
    %719 = vmatpush1.bf16.msra.mxu0 0
    %720 = vmatprep.subr.bf16.mxu0 0
    %721 = vmatpush1.bf16.msra.mxu0 0
    %722 = vmatprep.subr.bf16.mxu0 0
    %723 = vmatpush1.bf16.msra.mxu0 0
    %724 = vmatprep.subr.bf16.mxu0 0
    %725 = vmatpush1.bf16.msra.mxu0 0
    %726 = vmatprep.subr.bf16.mxu0 0
    %727 = vmatpush1.bf16.msra.mxu0 0
    %728 = vmatprep.subr.bf16.mxu0 0
    %729 = vmatpush1.bf16.msra.mxu0 0
    %730 = vmatprep.mubr.bf16.mxu0 0
    %731 = vmatmul.mubr.bf16.gmra.mrb[0].mxu0 %v505
    %v732 = vpop.f32.mrb[0].mxu0
    %v733 = vadd.f32 0.0, %v732
    %v734 = vpop.f32.mrb[0].mxu0
    %v735 = vadd.f32 0.0, %v734
    %v736 = vpop.f32.mrb[0].mxu0
    %v737 = vpop.f32.mrb[0].mxu0
    %738 = vdwg.mxu0
    %739 = vmatprep.subr.bf16.mxu0 %v637
    %740 = vmatpush1.bf16.msra.mxu0 %v636
    %741 = vmatprep.subr.bf16.mxu0 %v641
    %742 = vmatpush1.bf16.msra.mxu0 %v640
    %743 = vmatprep.subr.bf16.mxu0 %v645
    %744 = vmatpush1.bf16.msra.mxu0 %v644
    %745 = vmatprep.subr.bf16.mxu0 %v649
    %746 = vmatpush1.bf16.msra.mxu0 %v648
    %747 = vmatprep.subr.bf16.mxu0 %v653
    %748 = vmatpush1.bf16.msra.mxu0 %v652
    %749 = vmatprep.subr.bf16.mxu0 %v657
    %750 = vmatpush1.bf16.msra.mxu0 %v656
    %751 = vmatprep.subr.bf16.mxu0 %v661
    %752 = vmatpush1.bf16.msra.mxu0 %v660
    %753 = vmatprep.subr.bf16.mxu0 %v665
    %754 = vmatpush1.bf16.msra.mxu0 %v664
    %755 = vmatprep.subr.bf16.mxu0 0
    %756 = vmatpush1.bf16.msra.mxu0 0
    %757 = vmatprep.subr.bf16.mxu0 0
    %758 = vmatpush1.bf16.msra.mxu0 0
    %759 = vmatprep.subr.bf16.mxu0 0
    %760 = vmatpush1.bf16.msra.mxu0 0
    %761 = vmatprep.subr.bf16.mxu0 0
    %762 = vmatpush1.bf16.msra.mxu0 0
    %763 = vmatprep.subr.bf16.mxu0 0
    %764 = vmatpush1.bf16.msra.mxu0 0
    %765 = vmatprep.subr.bf16.mxu0 0
    %766 = vmatpush1.bf16.msra.mxu0 0
    %767 = vmatprep.subr.bf16.mxu0 0
    %768 = vmatpush1.bf16.msra.mxu0 0
    %769 = vmatprep.subr.bf16.mxu0 0
    %770 = vmatpush1.bf16.msra.mxu0 0
    %771 = vmatprep.mubr.bf16.mxu0 0
    %772 = vmatmul.mubr.bf16.gmra.mrb[0].mxu0 %v505
    %v773 = vpop.f32.mrb[0].mxu0
    %v774 = vadd.f32 0.0, %v773
    %v775 = vpop.f32.mrb[0].mxu0
    %v776 = vadd.f32 0.0, %v775
    %v777 = vpop.f32.mrb[0].mxu0
    %v778 = vpop.f32.mrb[0].mxu0
    %779 = vdwg.mxu0
    %v780 = vadd.f32 %v314, %v733
    %v781 = vadd.f32 %v353, %v735
    %v782 = vadd.f32 %v355, %v774
    %v783 = vadd.f32 %v394, %v776
    %v784 = vld [vmem:[#allocation7] sm:$0xf]
    %v786 = vlaneseq
    %v787 = vshrl.u32 %v786, 7
    %v788 = vsub.s32 0, %v787
    %v789 = vrot.slane %v784, %v788
    %v790 = vlaneseq
    %v791 = vshrl.u32 %v790, 7
    %v792 = vsub.s32 1, %v791
    %v793 = vrot.slane %v784, %v792
    %v794 = vlaneseq
    %v795 = vshrl.u32 %v794, 7
    %v796 = vsub.s32 2, %v795
    %v797 = vrot.slane %v784, %v796
    %v798 = vlaneseq
    %v799 = vshrl.u32 %v798, 7
    %v800 = vsub.s32 3, %v799
    %v801 = vrot.slane %v784, %v800
    %v806 = vadd.f32 %v780, %v789
    %v807 = vadd.f32 %v781, %v793
    %v808 = vadd.f32 %v782, %v797
    %v809 = vadd.f32 %v783, %v801
    %v810 = vxor.u32 %v806, 2147483648
    %v811 = vxor.u32 %v807, 2147483648
    %v812 = vxor.u32 %v808, 2147483648
    %v813 = vmul.f32 %v810, 1.442695
    %v814 = vpow.pop %v813
    %v815 = vmul.f32 %v811, 1.442695
    %v816 = vpow.pop %v815
    %v817 = vmul.f32 %v812, 1.442695
    %v818 = vpow.pop %v817
    %v819 = vadd.f32 %v814, 1.0
    %v820 = vadd.f32 %v816, 1.0
    %v821 = vadd.f32 %v818, 1.0
    %v822 = vrcp.pop %v819
    %v823 = vmul.f32 1.0, %v822
    %v824 = vrcp.pop %v820
    %v825 = vmul.f32 1.0, %v824
    %v826 = vrcp.pop %v821
    %v827 = vmul.f32 1.0, %v826
    %v828 = vtanh.pop %v809
    %v829 = vmul.f32 %v825, %v143
    %v830 = vmul.f32 %v823, %v828
    %v831 = vadd.f32 %v829, %v830
    %v832 = vtanh.pop %v831
    %v833 = vmul.f32 %v827, %v832
    %834 = vst [vmem:[#allocation14] sm:$0xff] %v833
    %835 = vst [vmem:[#allocation15] sm:$0xff] %v831
    %s836 = scalar_lea.vmem %s1, 8
    %v837 = vld [vmem:[%s836] sm:$0xff]
    %s838 = scalar_lea.vmem %s2, 8
    %v839 = vld [vmem:[%s838] sm:$0xff]
    %v840 = vpack.c.bf16 %v833, %v833
    %v841 = vld [vmem:[%s7] sm:$0xff]
    %v842 = vld [vmem:[%s7 + $0x8] sm:$0xff]
    %v843 = vld [vmem:[%s7 + $0x10] sm:$0xf]
    %v844 = vld [vmem:[%s7 + $0x14] sm:$0xff]
    %v845 = vld [vmem:[%s7 + $0x1c] sm:$0xff]
    %v846 = vld [vmem:[%s7 + $0x24] sm:$0xf]
    %v847 = vld [vmem:[%s7 + $0x28] sm:$0xff]
    %v848 = vld [vmem:[%s7 + $0x30] sm:$0xff]
    %v849 = vld [vmem:[%s7 + $0x38] sm:$0xf]
    %v850 = vld [vmem:[%s7 + $0x3c] sm:$0xff]
    %v851 = vld [vmem:[%s7 + $0x44] sm:$0xff]
    %v852 = vld [vmem:[%s7 + $0x4c] sm:$0xf]
    %v853 = vld [vmem:[%s7 + $0x50] sm:$0xff]
    %v854 = vld [vmem:[%s7 + $0x58] sm:$0xff]
    %v855 = vld [vmem:[%s7 + $0x60] sm:$0xf]
    %v856 = vld [vmem:[%s7 + $0x64] sm:$0xff]
    %v857 = vld [vmem:[%s7 + $0x6c] sm:$0xff]
    %v858 = vld [vmem:[%s7 + $0x74] sm:$0xf]
    %v859 = vld [vmem:[%s7 + $0x78] sm:$0xff]
    %v860 = vld [vmem:[%s7 + $0x80] sm:$0xff]
    %v861 = vld [vmem:[%s7 + $0x88] sm:$0xf]
    %v862 = vld [vmem:[%s7 + $0x8c] sm:$0xff]
    %v863 = vld [vmem:[%s7 + $0x94] sm:$0xff]
    %v864 = vld [vmem:[%s7 + $0x9c] sm:$0xf]
    %v865 = vld [vmem:[%s7 + $0xa0] sm:$0xff]
    %v866 = vld [vmem:[%s7 + $0xa8] sm:$0xff]
    %v867 = vld [vmem:[%s7 + $0xb0] sm:$0xf]
    %v868 = vld [vmem:[%s7 + $0xb4] sm:$0xff]
    %v869 = vld [vmem:[%s7 + $0xbc] sm:$0xff]
    %v870 = vld [vmem:[%s7 + $0xc4] sm:$0xf]
    %v871 = vld [vmem:[%s7 + $0xc8] sm:$0xff]
    %v872 = vld [vmem:[%s7 + $0xd0] sm:$0xff]
    %v873 = vld [vmem:[%s7 + $0xd8] sm:$0xf]
    %v874 = vld [vmem:[%s7 + $0xdc] sm:$0xff]
    %v875 = vld [vmem:[%s7 + $0xe4] sm:$0xff]
    %v876 = vld [vmem:[%s7 + $0xec] sm:$0xf]
    %v877 = vld [vmem:[%s7 + $0xf0] sm:$0xff]
    %v878 = vld [vmem:[%s7 + $0xf8] sm:$0xff]
    %v879 = vld [vmem:[%s7 + $0x100] sm:$0xf]
    %v880 = vld [vmem:[%s7 + $0x104] sm:$0xff]
    %v881 = vld [vmem:[%s7 + $0x10c] sm:$0xff]
    %v882 = vld [vmem:[%s7 + $0x114] sm:$0xf]
    %v883 = vld [vmem:[%s7 + $0x118] sm:$0xff]
    %v884 = vld [vmem:[%s7 + $0x120] sm:$0xff]
    %v885 = vld [vmem:[%s7 + $0x128] sm:$0xf]
    %v886 = vld [vmem:[%s7 + $0x12c] sm:$0xff]
    %v887 = vld [vmem:[%s7 + $0x134] sm:$0xff]
    %v888 = vld [vmem:[%s7 + $0x13c] sm:$0xf]
    %v937 = vunpack.c.l.b16 %v841
    %v938 = vunpack.c.h.b16 %v841
    %v939 = vunpack.c.l.b16 %v842
    %v940 = vunpack.c.h.b16 %v842
    %v941 = vunpack.c.l.b16 %v843
    %v942 = vunpack.c.l.b16 %v844
    %v943 = vunpack.c.h.b16 %v844
    %v944 = vunpack.c.l.b16 %v845
    %v945 = vunpack.c.h.b16 %v845
    %v946 = vunpack.c.l.b16 %v846
    %v947 = vunpack.c.l.b16 %v847
    %v948 = vunpack.c.h.b16 %v847
    %v949 = vunpack.c.l.b16 %v848
    %v950 = vunpack.c.h.b16 %v848
    %v951 = vunpack.c.l.b16 %v849
    %v952 = vunpack.c.l.b16 %v850
    %v953 = vunpack.c.h.b16 %v850
    %v954 = vunpack.c.l.b16 %v851
    %v955 = vunpack.c.h.b16 %v851
    %v956 = vunpack.c.l.b16 %v852
    %v957 = vunpack.c.l.b16 %v853
    %v958 = vunpack.c.h.b16 %v853
    %v959 = vunpack.c.l.b16 %v854
    %v960 = vunpack.c.h.b16 %v854
    %v961 = vunpack.c.l.b16 %v855
    %v962 = vunpack.c.l.b16 %v856
    %v963 = vunpack.c.h.b16 %v856
    %v964 = vunpack.c.l.b16 %v857
    %v965 = vunpack.c.h.b16 %v857
    %v966 = vunpack.c.l.b16 %v858
    %v967 = vunpack.c.l.b16 %v859
    %v968 = vunpack.c.h.b16 %v859
    %v969 = vunpack.c.l.b16 %v860
    %v970 = vunpack.c.h.b16 %v860
    %v971 = vunpack.c.l.b16 %v861
    %v972 = vunpack.c.l.b16 %v862
    %v973 = vunpack.c.h.b16 %v862
    %v974 = vunpack.c.l.b16 %v863
    %v975 = vunpack.c.h.b16 %v863
    %v976 = vunpack.c.l.b16 %v864
    %v977 = vunpack.c.l.b16 %v865
    %v978 = vunpack.c.h.b16 %v865
    %v979 = vunpack.c.l.b16 %v866
    %v980 = vunpack.c.h.b16 %v866
    %v981 = vunpack.c.l.b16 %v867
    %v982 = vunpack.c.l.b16 %v868
    %v983 = vunpack.c.h.b16 %v868
    %v984 = vunpack.c.l.b16 %v869
    %v985 = vunpack.c.h.b16 %v869
    %v986 = vunpack.c.l.b16 %v870
    %v987 = vunpack.c.l.b16 %v871
    %v988 = vunpack.c.h.b16 %v871
    %v989 = vunpack.c.l.b16 %v872
    %v990 = vunpack.c.h.b16 %v872
    %v991 = vunpack.c.l.b16 %v873
    %v992 = vunpack.c.l.b16 %v874
    %v993 = vunpack.c.h.b16 %v874
    %v994 = vunpack.c.l.b16 %v875
    %v995 = vunpack.c.h.b16 %v875
    %v996 = vunpack.c.l.b16 %v876
    %v997 = vunpack.c.l.b16 %v877
    %v998 = vunpack.c.h.b16 %v877
    %v999 = vunpack.c.l.b16 %v878
    %v1000 = vunpack.c.h.b16 %v878
    %v1001 = vunpack.c.l.b16 %v879
    %v1002 = vunpack.c.l.b16 %v880
    %v1003 = vunpack.c.h.b16 %v880
    %v1004 = vunpack.c.l.b16 %v881
    %v1005 = vunpack.c.h.b16 %v881
    %v1006 = vunpack.c.l.b16 %v882
    %v1007 = vunpack.c.l.b16 %v883
    %v1008 = vunpack.c.h.b16 %v883
    %v1009 = vunpack.c.l.b16 %v884
    %v1010 = vunpack.c.h.b16 %v884
    %v1011 = vunpack.c.l.b16 %v885
    %v1012 = vunpack.c.l.b16 %v886
    %v1013 = vunpack.c.h.b16 %v886
    %v1014 = vunpack.c.l.b16 %v887
    %v1015 = vunpack.c.h.b16 %v887
    %v1016 = vunpack.c.l.b16 %v888
    %v1017 = vpack.c.b16 %v942, %v937
    %v1018 = vpack.c.b16 %v943, %v938
    %v1019 = vpack.c.b16 %v944, %v939
    %v1020 = vpack.c.b16 %v945, %v940
    %v1021 = vpack.c.b16 %v946, %v941
    %v1022 = vpack.c.b16 %v952, %v947
    %v1023 = vpack.c.b16 %v953, %v948
    %v1024 = vpack.c.b16 %v954, %v949
    %v1025 = vpack.c.b16 %v955, %v950
    %v1026 = vpack.c.b16 %v956, %v951
    %v1027 = vpack.c.b16 %v962, %v957
    %v1028 = vpack.c.b16 %v963, %v958
    %v1029 = vpack.c.b16 %v964, %v959
    %v1030 = vpack.c.b16 %v965, %v960
    %v1031 = vpack.c.b16 %v966, %v961
    %v1032 = vpack.c.b16 %v972, %v967
    %v1033 = vpack.c.b16 %v973, %v968
    %v1034 = vpack.c.b16 %v974, %v969
    %v1035 = vpack.c.b16 %v975, %v970
    %v1036 = vpack.c.b16 %v976, %v971
    %v1037 = vpack.c.b16 %v982, %v977
    %v1038 = vpack.c.b16 %v983, %v978
    %v1039 = vpack.c.b16 %v984, %v979
    %v1040 = vpack.c.b16 %v985, %v980
    %v1041 = vpack.c.b16 %v986, %v981
    %v1042 = vpack.c.b16 %v992, %v987
    %v1043 = vpack.c.b16 %v993, %v988
    %v1044 = vpack.c.b16 %v994, %v989
    %v1045 = vpack.c.b16 %v995, %v990
    %v1046 = vpack.c.b16 %v996, %v991
    %v1047 = vpack.c.b16 %v1002, %v997
    %v1048 = vpack.c.b16 %v1003, %v998
    %v1049 = vpack.c.b16 %v1004, %v999
    %v1050 = vpack.c.b16 %v1005, %v1000
    %v1051 = vpack.c.b16 %v1006, %v1001
    %v1052 = vpack.c.b16 %v1012, %v1007
    %v1053 = vpack.c.b16 %v1013, %v1008
    %v1054 = vpack.c.b16 %v1014, %v1009
    %v1055 = vpack.c.b16 %v1015, %v1010
    %v1056 = vpack.c.b16 %v1016, %v1011
    %1097 = vmatprep.subr.bf16.mxu0 %v1018
    %1098 = vmatpush1.bf16.msra.mxu0 %v1017
    %1099 = vmatprep.subr.bf16.mxu0 %v1023
    %1100 = vmatpush1.bf16.msra.mxu0 %v1022
    %1101 = vmatprep.subr.bf16.mxu0 %v1028
    %1102 = vmatpush1.bf16.msra.mxu0 %v1027
    %1103 = vmatprep.subr.bf16.mxu0 %v1033
    %1104 = vmatpush1.bf16.msra.mxu0 %v1032
    %1105 = vmatprep.subr.bf16.mxu0 %v1038
    %1106 = vmatpush1.bf16.msra.mxu0 %v1037
    %1107 = vmatprep.subr.bf16.mxu0 %v1043
    %1108 = vmatpush1.bf16.msra.mxu0 %v1042
    %1109 = vmatprep.subr.bf16.mxu0 %v1048
    %1110 = vmatpush1.bf16.msra.mxu0 %v1047
    %1111 = vmatprep.subr.bf16.mxu0 %v1053
    %1112 = vmatpush1.bf16.msra.mxu0 %v1052
    %1113 = vmatprep.subr.bf16.mxu0 0
    %1114 = vmatpush1.bf16.msra.mxu0 0
    %1115 = vmatprep.subr.bf16.mxu0 0
    %1116 = vmatpush1.bf16.msra.mxu0 0
    %1117 = vmatprep.subr.bf16.mxu0 0
    %1118 = vmatpush1.bf16.msra.mxu0 0
    %1119 = vmatprep.subr.bf16.mxu0 0
    %1120 = vmatpush1.bf16.msra.mxu0 0
    %1121 = vmatprep.subr.bf16.mxu0 0
    %1122 = vmatpush1.bf16.msra.mxu0 0
    %1123 = vmatprep.subr.bf16.mxu0 0
    %1124 = vmatpush1.bf16.msra.mxu0 0
    %1125 = vmatprep.subr.bf16.mxu0 0
    %1126 = vmatpush1.bf16.msra.mxu0 0
    %1127 = vmatprep.subr.bf16.mxu0 0
    %1128 = vmatpush1.bf16.msra.mxu0 0
    %1129 = vmatprep.mubr.bf16.mxu0 0
    %1130 = vmatmul.mubr.bf16.gmra.mrb[0].mxu0 %v840
    %v1131 = vpop.f32.mrb[0].mxu0
    %v1132 = vadd.f32 0.0, %v1131
    %v1133 = vpop.f32.mrb[0].mxu0
    %v1134 = vadd.f32 0.0, %v1133
    %v1135 = vpop.f32.mrb[0].mxu0
    %v1136 = vpop.f32.mrb[0].mxu0
    %1137 = vdwg.mxu0
    %1138 = vmatprep.subr.bf16.mxu0 %v1020
    %1139 = vmatpush1.bf16.msra.mxu0 %v1019
    %1140 = vmatprep.subr.bf16.mxu0 %v1025
    %1141 = vmatpush1.bf16.msra.mxu0 %v1024
    %1142 = vmatprep.subr.bf16.mxu0 %v1030
    %1143 = vmatpush1.bf16.msra.mxu0 %v1029
    %1144 = vmatprep.subr.bf16.mxu0 %v1035
    %1145 = vmatpush1.bf16.msra.mxu0 %v1034
    %1146 = vmatprep.subr.bf16.mxu0 %v1040
    %1147 = vmatpush1.bf16.msra.mxu0 %v1039
    %1148 = vmatprep.subr.bf16.mxu0 %v1045
    %1149 = vmatpush1.bf16.msra.mxu0 %v1044
    %1150 = vmatprep.subr.bf16.mxu0 %v1050
    %1151 = vmatpush1.bf16.msra.mxu0 %v1049
    %1152 = vmatprep.subr.bf16.mxu0 %v1055
    %1153 = vmatpush1.bf16.msra.mxu0 %v1054
    %1154 = vmatprep.subr.bf16.mxu0 0
    %1155 = vmatpush1.bf16.msra.mxu0 0
    %1156 = vmatprep.subr.bf16.mxu0 0
    %1157 = vmatpush1.bf16.msra.mxu0 0
    %1158 = vmatprep.subr.bf16.mxu0 0
    %1159 = vmatpush1.bf16.msra.mxu0 0
    %1160 = vmatprep.subr.bf16.mxu0 0
    %1161 = vmatpush1.bf16.msra.mxu0 0
    %1162 = vmatprep.subr.bf16.mxu0 0
    %1163 = vmatpush1.bf16.msra.mxu0 0
    %1164 = vmatprep.subr.bf16.mxu0 0
    %1165 = vmatpush1.bf16.msra.mxu0 0
    %1166 = vmatprep.subr.bf16.mxu0 0
    %1167 = vmatpush1.bf16.msra.mxu0 0
    %1168 = vmatprep.subr.bf16.mxu0 0
    %1169 = vmatpush1.bf16.msra.mxu0 0
    %1170 = vmatprep.mubr.bf16.mxu0 0
    %1171 = vmatmul.mubr.bf16.gmra.mrb[0].mxu0 %v840
    %v1172 = vpop.f32.mrb[0].mxu0
    %v1173 = vadd.f32 0.0, %v1172
    %v1174 = vpop.f32.mrb[0].mxu0
    %v1175 = vadd.f32 0.0, %v1174
    %v1176 = vpop.f32.mrb[0].mxu0
    %v1177 = vpop.f32.mrb[0].mxu0
    %1178 = vdwg.mxu0
    %1179 = vmatprep.subr.bf16.mxu0 0
    %1180 = vmatpush1.bf16.msra.mxu0 %v1021
    %1181 = vmatprep.subr.bf16.mxu0 0
    %1182 = vmatpush1.bf16.msra.mxu0 %v1026
    %1183 = vmatprep.subr.bf16.mxu0 0
    %1184 = vmatpush1.bf16.msra.mxu0 %v1031
    %1185 = vmatprep.subr.bf16.mxu0 0
    %1186 = vmatpush1.bf16.msra.mxu0 %v1036
    %1187 = vmatprep.subr.bf16.mxu0 0
    %1188 = vmatpush1.bf16.msra.mxu0 %v1041
    %1189 = vmatprep.subr.bf16.mxu0 0
    %1190 = vmatpush1.bf16.msra.mxu0 %v1046
    %1191 = vmatprep.subr.bf16.mxu0 0
    %1192 = vmatpush1.bf16.msra.mxu0 %v1051
    %1193 = vmatprep.subr.bf16.mxu0 0
    %1194 = vmatpush1.bf16.msra.mxu0 %v1056
    %1195 = vmatprep.subr.bf16.mxu0 0
    %1196 = vmatpush1.bf16.msra.mxu0 0
    %1197 = vmatprep.subr.bf16.mxu0 0
    %1198 = vmatpush1.bf16.msra.mxu0 0
    %1199 = vmatprep.subr.bf16.mxu0 0
    %1200 = vmatpush1.bf16.msra.mxu0 0
    %1201 = vmatprep.subr.bf16.mxu0 0
    %1202 = vmatpush1.bf16.msra.mxu0 0
    %1203 = vmatprep.subr.bf16.mxu0 0
    %1204 = vmatpush1.bf16.msra.mxu0 0
    %1205 = vmatprep.subr.bf16.mxu0 0
    %1206 = vmatpush1.bf16.msra.mxu0 0
    %1207 = vmatprep.subr.bf16.mxu0 0
    %1208 = vmatpush1.bf16.msra.mxu0 0
    %1209 = vmatprep.subr.bf16.mxu0 0
    %1210 = vmatpush1.bf16.msra.mxu0 0
    %1211 = vmatprep.mubr.bf16.mxu0 0
    %1212 = vmatmul.mubr.bf16.gmra.mrb[0].mxu0 %v840
    %v1213 = vpop.f32.mrb[0].mxu0
    %v1214 = vadd.f32 0.0, %v1213
    %v1215 = vpop.f32.mrb[0].mxu0
    %v1216 = vpop.f32.mrb[0].mxu0
    %v1217 = vpop.f32.mrb[0].mxu0
    %1218 = vdwg.mxu0
    %v1219 = vpack.c.bf16 %v837, %v837
    %v1220 = vld [vmem:[#allocation8] sm:$0xf]
    %v1221 = vld [vmem:[#allocation8 + $0x4] sm:$0xf]
    %v1222 = vld [vmem:[#allocation8 + $0x8] sm:$0xf]
    %v1223 = vld [vmem:[#allocation8 + $0xc] sm:$0xf]
    %v1224 = vld [vmem:[#allocation8 + $0x10] sm:$0xf]
    %v1225 = vld [vmem:[#allocation8 + $0x14] sm:$0xf]
    %v1226 = vld [vmem:[#allocation8 + $0x18] sm:$0xf]
    %v1227 = vld [vmem:[#allocation8 + $0x1c] sm:$0xf]
    %v1228 = vld [vmem:[#allocation8 + $0x20] sm:$0xf]
    %v1229 = vld [vmem:[#allocation8 + $0x24] sm:$0xf]
    %v1230 = vld [vmem:[#allocation8 + $0x28] sm:$0xf]
    %v1231 = vld [vmem:[#allocation8 + $0x2c] sm:$0xf]
    %v1232 = vld [vmem:[#allocation8 + $0x30] sm:$0xf]
    %v1233 = vld [vmem:[#allocation8 + $0x34] sm:$0xf]
    %v1234 = vld [vmem:[#allocation8 + $0x38] sm:$0xf]
    %v1235 = vld [vmem:[#allocation8 + $0x3c] sm:$0xf]
    %v1252 = vunpack.c.l.b16 %v1220
    %v1253 = vunpack.c.l.b16 %v1221
    %v1254 = vunpack.c.l.b16 %v1222
    %v1255 = vunpack.c.l.b16 %v1223
    %v1256 = vunpack.c.l.b16 %v1224
    %v1257 = vunpack.c.l.b16 %v1225
    %v1258 = vunpack.c.l.b16 %v1226
    %v1259 = vunpack.c.l.b16 %v1227
    %v1260 = vunpack.c.l.b16 %v1228
    %v1261 = vunpack.c.l.b16 %v1229
    %v1262 = vunpack.c.l.b16 %v1230
    %v1263 = vunpack.c.l.b16 %v1231
    %v1264 = vunpack.c.l.b16 %v1232
    %v1265 = vunpack.c.l.b16 %v1233
    %v1266 = vunpack.c.l.b16 %v1234
    %v1267 = vunpack.c.l.b16 %v1235
    %v1268 = vpack.c.b16 %v1253, %v1252
    %v1269 = vpack.c.b16 %v1255, %v1254
    %v1270 = vpack.c.b16 %v1257, %v1256
    %v1271 = vpack.c.b16 %v1259, %v1258
    %v1272 = vpack.c.b16 %v1261, %v1260
    %v1273 = vpack.c.b16 %v1263, %v1262
    %v1274 = vpack.c.b16 %v1265, %v1264
    %v1275 = vpack.c.b16 %v1267, %v1266
    %1284 = vmatprep.subr.bf16.mxu0 0
    %1285 = vmatpush1.bf16.msra.mxu0 %v1268
    %1286 = vmatprep.subr.bf16.mxu0 0
    %1287 = vmatpush1.bf16.msra.mxu0 %v1269
    %1288 = vmatprep.subr.bf16.mxu0 0
    %1289 = vmatpush1.bf16.msra.mxu0 %v1270
    %1290 = vmatprep.subr.bf16.mxu0 0
    %1291 = vmatpush1.bf16.msra.mxu0 %v1271
    %1292 = vmatprep.subr.bf16.mxu0 0
    %1293 = vmatpush1.bf16.msra.mxu0 %v1272
    %1294 = vmatprep.subr.bf16.mxu0 0
    %1295 = vmatpush1.bf16.msra.mxu0 %v1273
    %1296 = vmatprep.subr.bf16.mxu0 0
    %1297 = vmatpush1.bf16.msra.mxu0 %v1274
    %1298 = vmatprep.subr.bf16.mxu0 0
    %1299 = vmatpush1.bf16.msra.mxu0 %v1275
    %1300 = vmatprep.subr.bf16.mxu0 0
    %1301 = vmatpush1.bf16.msra.mxu0 0
    %1302 = vmatprep.subr.bf16.mxu0 0
    %1303 = vmatpush1.bf16.msra.mxu0 0
    %1304 = vmatprep.subr.bf16.mxu0 0
    %1305 = vmatpush1.bf16.msra.mxu0 0
    %1306 = vmatprep.subr.bf16.mxu0 0
    %1307 = vmatpush1.bf16.msra.mxu0 0
    %1308 = vmatprep.subr.bf16.mxu0 0
    %1309 = vmatpush1.bf16.msra.mxu0 0
    %1310 = vmatprep.subr.bf16.mxu0 0
    %1311 = vmatpush1.bf16.msra.mxu0 0
    %1312 = vmatprep.subr.bf16.mxu0 0
    %1313 = vmatpush1.bf16.msra.mxu0 0
    %1314 = vmatprep.subr.bf16.mxu0 0
    %1315 = vmatpush1.bf16.msra.mxu0 0
    %1316 = vmatprep.mubr.bf16.mxu0 0
    %1317 = vmatmul.mubr.bf16.gmra.mrb[0].mxu0 %v1219
    %v1318 = vpop.f32.mrb[0].mxu0
    %v1319 = vadd.f32 0.0, %v1318
    %v1320 = vpop.f32.mrb[0].mxu0
    %v1321 = vpop.f32.mrb[0].mxu0
    %v1322 = vpop.f32.mrb[0].mxu0
    %1323 = vdwg.mxu0
    %v1324 = vmul.f32 %v1132, %v1319
    %v1325 = vpack.c.bf16 %v1324, %v1324
    %v1326 = vld [vmem:[#allocation10] sm:$0xff]
    %v1327 = vld [vmem:[#allocation10 + $0x8] sm:$0xff]
    %v1328 = vld [vmem:[#allocation10 + $0x10] sm:$0xff]
    %v1329 = vld [vmem:[#allocation10 + $0x18] sm:$0xff]
    %v1330 = vld [vmem:[#allocation10 + $0x20] sm:$0xff]
    %v1331 = vld [vmem:[#allocation10 + $0x28] sm:$0xff]
    %v1332 = vld [vmem:[#allocation10 + $0x30] sm:$0xff]
    %v1333 = vld [vmem:[#allocation10 + $0x38] sm:$0xff]
    %v1334 = vld [vmem:[#allocation10 + $0x40] sm:$0xff]
    %v1335 = vld [vmem:[#allocation10 + $0x48] sm:$0xff]
    %v1336 = vld [vmem:[#allocation10 + $0x50] sm:$0xff]
    %v1337 = vld [vmem:[#allocation10 + $0x58] sm:$0xff]
    %v1338 = vld [vmem:[#allocation10 + $0x60] sm:$0xff]
    %v1339 = vld [vmem:[#allocation10 + $0x68] sm:$0xff]
    %v1340 = vld [vmem:[#allocation10 + $0x70] sm:$0xff]
    %v1341 = vld [vmem:[#allocation10 + $0x78] sm:$0xff]
    %v1342 = vld [vmem:[#allocation10 + $0x80] sm:$0xff]
    %v1343 = vld [vmem:[#allocation10 + $0x88] sm:$0xff]
    %v1344 = vld [vmem:[#allocation10 + $0x90] sm:$0xff]
    %v1345 = vld [vmem:[#allocation10 + $0x98] sm:$0xff]
    %v1346 = vld [vmem:[#allocation10 + $0xa0] sm:$0xff]
    %v1347 = vld [vmem:[#allocation10 + $0xa8] sm:$0xff]
    %v1348 = vld [vmem:[#allocation10 + $0xb0] sm:$0xff]
    %v1349 = vld [vmem:[#allocation10 + $0xb8] sm:$0xff]
    %v1350 = vld [vmem:[#allocation10 + $0xc0] sm:$0xff]
    %v1351 = vld [vmem:[#allocation10 + $0xc8] sm:$0xff]
    %v1352 = vld [vmem:[#allocation10 + $0xd0] sm:$0xff]
    %v1353 = vld [vmem:[#allocation10 + $0xd8] sm:$0xff]
    %v1354 = vld [vmem:[#allocation10 + $0xe0] sm:$0xff]
    %v1355 = vld [vmem:[#allocation10 + $0xe8] sm:$0xff]
    %v1356 = vld [vmem:[#allocation10 + $0xf0] sm:$0xff]
    %v1357 = vld [vmem:[#allocation10 + $0xf8] sm:$0xff]
    %v1390 = vunpack.c.l.b16 %v1326
    %v1391 = vunpack.c.h.b16 %v1326
    %v1392 = vunpack.c.l.b16 %v1327
    %v1393 = vunpack.c.h.b16 %v1327
    %v1394 = vunpack.c.l.b16 %v1328
    %v1395 = vunpack.c.h.b16 %v1328
    %v1396 = vunpack.c.l.b16 %v1329
    %v1397 = vunpack.c.h.b16 %v1329
    %v1398 = vunpack.c.l.b16 %v1330
    %v1399 = vunpack.c.h.b16 %v1330
    %v1400 = vunpack.c.l.b16 %v1331
    %v1401 = vunpack.c.h.b16 %v1331
    %v1402 = vunpack.c.l.b16 %v1332
    %v1403 = vunpack.c.h.b16 %v1332
    %v1404 = vunpack.c.l.b16 %v1333
    %v1405 = vunpack.c.h.b16 %v1333
    %v1406 = vunpack.c.l.b16 %v1334
    %v1407 = vunpack.c.h.b16 %v1334
    %v1408 = vunpack.c.l.b16 %v1335
    %v1409 = vunpack.c.h.b16 %v1335
    %v1410 = vunpack.c.l.b16 %v1336
    %v1411 = vunpack.c.h.b16 %v1336
    %v1412 = vunpack.c.l.b16 %v1337
    %v1413 = vunpack.c.h.b16 %v1337
    %v1414 = vunpack.c.l.b16 %v1338
    %v1415 = vunpack.c.h.b16 %v1338
    %v1416 = vunpack.c.l.b16 %v1339
    %v1417 = vunpack.c.h.b16 %v1339
    %v1418 = vunpack.c.l.b16 %v1340
    %v1419 = vunpack.c.h.b16 %v1340
    %v1420 = vunpack.c.l.b16 %v1341
    %v1421 = vunpack.c.h.b16 %v1341
    %v1422 = vunpack.c.l.b16 %v1342
    %v1423 = vunpack.c.h.b16 %v1342
    %v1424 = vunpack.c.l.b16 %v1343
    %v1425 = vunpack.c.h.b16 %v1343
    %v1426 = vunpack.c.l.b16 %v1344
    %v1427 = vunpack.c.h.b16 %v1344
    %v1428 = vunpack.c.l.b16 %v1345
    %v1429 = vunpack.c.h.b16 %v1345
    %v1430 = vunpack.c.l.b16 %v1346
    %v1431 = vunpack.c.h.b16 %v1346
    %v1432 = vunpack.c.l.b16 %v1347
    %v1433 = vunpack.c.h.b16 %v1347
    %v1434 = vunpack.c.l.b16 %v1348
    %v1435 = vunpack.c.h.b16 %v1348
    %v1436 = vunpack.c.l.b16 %v1349
    %v1437 = vunpack.c.h.b16 %v1349
    %v1438 = vunpack.c.l.b16 %v1350
    %v1439 = vunpack.c.h.b16 %v1350
    %v1440 = vunpack.c.l.b16 %v1351
    %v1441 = vunpack.c.h.b16 %v1351
    %v1442 = vunpack.c.l.b16 %v1352
    %v1443 = vunpack.c.h.b16 %v1352
    %v1444 = vunpack.c.l.b16 %v1353
    %v1445 = vunpack.c.h.b16 %v1353
    %v1446 = vunpack.c.l.b16 %v1354
    %v1447 = vunpack.c.h.b16 %v1354
    %v1448 = vunpack.c.l.b16 %v1355
    %v1449 = vunpack.c.h.b16 %v1355
    %v1450 = vunpack.c.l.b16 %v1356
    %v1451 = vunpack.c.h.b16 %v1356
    %v1452 = vunpack.c.l.b16 %v1357
    %v1453 = vunpack.c.h.b16 %v1357
    %v1454 = vpack.c.b16 %v1394, %v1390
    %v1455 = vpack.c.b16 %v1395, %v1391
    %v1456 = vpack.c.b16 %v1396, %v1392
    %v1457 = vpack.c.b16 %v1397, %v1393
    %v1458 = vpack.c.b16 %v1402, %v1398
    %v1459 = vpack.c.b16 %v1403, %v1399
    %v1460 = vpack.c.b16 %v1404, %v1400
    %v1461 = vpack.c.b16 %v1405, %v1401
    %v1462 = vpack.c.b16 %v1410, %v1406
    %v1463 = vpack.c.b16 %v1411, %v1407
    %v1464 = vpack.c.b16 %v1412, %v1408
    %v1465 = vpack.c.b16 %v1413, %v1409
    %v1466 = vpack.c.b16 %v1418, %v1414
    %v1467 = vpack.c.b16 %v1419, %v1415
    %v1468 = vpack.c.b16 %v1420, %v1416
    %v1469 = vpack.c.b16 %v1421, %v1417
    %v1470 = vpack.c.b16 %v1426, %v1422
    %v1471 = vpack.c.b16 %v1427, %v1423
    %v1472 = vpack.c.b16 %v1428, %v1424
    %v1473 = vpack.c.b16 %v1429, %v1425
    %v1474 = vpack.c.b16 %v1434, %v1430
    %v1475 = vpack.c.b16 %v1435, %v1431
    %v1476 = vpack.c.b16 %v1436, %v1432
    %v1477 = vpack.c.b16 %v1437, %v1433
    %v1478 = vpack.c.b16 %v1442, %v1438
    %v1479 = vpack.c.b16 %v1443, %v1439
    %v1480 = vpack.c.b16 %v1444, %v1440
    %v1481 = vpack.c.b16 %v1445, %v1441
    %v1482 = vpack.c.b16 %v1450, %v1446
    %v1483 = vpack.c.b16 %v1451, %v1447
    %v1484 = vpack.c.b16 %v1452, %v1448
    %v1485 = vpack.c.b16 %v1453, %v1449
    %1518 = vmatprep.subr.bf16.mxu0 %v1455
    %1519 = vmatpush1.bf16.msra.mxu0 %v1454
    %1520 = vmatprep.subr.bf16.mxu0 %v1459
    %1521 = vmatpush1.bf16.msra.mxu0 %v1458
    %1522 = vmatprep.subr.bf16.mxu0 %v1463
    %1523 = vmatpush1.bf16.msra.mxu0 %v1462
    %1524 = vmatprep.subr.bf16.mxu0 %v1467
    %1525 = vmatpush1.bf16.msra.mxu0 %v1466
    %1526 = vmatprep.subr.bf16.mxu0 %v1471
    %1527 = vmatpush1.bf16.msra.mxu0 %v1470
    %1528 = vmatprep.subr.bf16.mxu0 %v1475
    %1529 = vmatpush1.bf16.msra.mxu0 %v1474
    %1530 = vmatprep.subr.bf16.mxu0 %v1479
    %1531 = vmatpush1.bf16.msra.mxu0 %v1478
    %1532 = vmatprep.subr.bf16.mxu0 %v1483
    %1533 = vmatpush1.bf16.msra.mxu0 %v1482
    %1534 = vmatprep.subr.bf16.mxu0 0
    %1535 = vmatpush1.bf16.msra.mxu0 0
    %1536 = vmatprep.subr.bf16.mxu0 0
    %1537 = vmatpush1.bf16.msra.mxu0 0
    %1538 = vmatprep.subr.bf16.mxu0 0
    %1539 = vmatpush1.bf16.msra.mxu0 0
    %1540 = vmatprep.subr.bf16.mxu0 0
    %1541 = vmatpush1.bf16.msra.mxu0 0
    %1542 = vmatprep.subr.bf16.mxu0 0
    %1543 = vmatpush1.bf16.msra.mxu0 0
    %1544 = vmatprep.subr.bf16.mxu0 0
    %1545 = vmatpush1.bf16.msra.mxu0 0
    %1546 = vmatprep.subr.bf16.mxu0 0
    %1547 = vmatpush1.bf16.msra.mxu0 0
    %1548 = vmatprep.subr.bf16.mxu0 0
    %1549 = vmatpush1.bf16.msra.mxu0 0
    %1550 = vmatprep.mubr.bf16.mxu0 0
    %1551 = vmatmul.mubr.bf16.gmra.mrb[0].mxu0 %v1325
    %v1552 = vpop.f32.mrb[0].mxu0
    %v1553 = vadd.f32 0.0, %v1552
    %v1554 = vpop.f32.mrb[0].mxu0
    %v1555 = vadd.f32 0.0, %v1554
    %v1556 = vpop.f32.mrb[0].mxu0
    %v1557 = vpop.f32.mrb[0].mxu0
    %1558 = vdwg.mxu0
    %1559 = vmatprep.subr.bf16.mxu0 %v1457
    %1560 = vmatpush1.bf16.msra.mxu0 %v1456
    %1561 = vmatprep.subr.bf16.mxu0 %v1461
    %1562 = vmatpush1.bf16.msra.mxu0 %v1460
    %1563 = vmatprep.subr.bf16.mxu0 %v1465
    %1564 = vmatpush1.bf16.msra.mxu0 %v1464
    %1565 = vmatprep.subr.bf16.mxu0 %v1469
    %1566 = vmatpush1.bf16.msra.mxu0 %v1468
    %1567 = vmatprep.subr.bf16.mxu0 %v1473
    %1568 = vmatpush1.bf16.msra.mxu0 %v1472
    %1569 = vmatprep.subr.bf16.mxu0 %v1477
    %1570 = vmatpush1.bf16.msra.mxu0 %v1476
    %1571 = vmatprep.subr.bf16.mxu0 %v1481
    %1572 = vmatpush1.bf16.msra.mxu0 %v1480
    %1573 = vmatprep.subr.bf16.mxu0 %v1485
    %1574 = vmatpush1.bf16.msra.mxu0 %v1484
    %1575 = vmatprep.subr.bf16.mxu0 0
    %1576 = vmatpush1.bf16.msra.mxu0 0
    %1577 = vmatprep.subr.bf16.mxu0 0
    %1578 = vmatpush1.bf16.msra.mxu0 0
    %1579 = vmatprep.subr.bf16.mxu0 0
    %1580 = vmatpush1.bf16.msra.mxu0 0
    %1581 = vmatprep.subr.bf16.mxu0 0
    %1582 = vmatpush1.bf16.msra.mxu0 0
    %1583 = vmatprep.subr.bf16.mxu0 0
    %1584 = vmatpush1.bf16.msra.mxu0 0
    %1585 = vmatprep.subr.bf16.mxu0 0
    %1586 = vmatpush1.bf16.msra.mxu0 0
    %1587 = vmatprep.subr.bf16.mxu0 0
    %1588 = vmatpush1.bf16.msra.mxu0 0
    %1589 = vmatprep.subr.bf16.mxu0 0
    %1590 = vmatpush1.bf16.msra.mxu0 0
    %1591 = vmatprep.mubr.bf16.mxu0 0
    %1592 = vmatmul.mubr.bf16.gmra.mrb[0].mxu0 %v1325
    %v1593 = vpop.f32.mrb[0].mxu0
    %v1594 = vadd.f32 0.0, %v1593
    %v1595 = vpop.f32.mrb[0].mxu0
    %v1596 = vadd.f32 0.0, %v1595
    %v1597 = vpop.f32.mrb[0].mxu0
    %v1598 = vpop.f32.mrb[0].mxu0
    %1599 = vdwg.mxu0
    %v1600 = vadd.f32 %v1134, %v1553
    %v1601 = vadd.f32 %v1173, %v1555
    %v1602 = vadd.f32 %v1175, %v1594
    %v1603 = vadd.f32 %v1214, %v1596
    %v1604 = vld [vmem:[#allocation11] sm:$0xf]
    %v1606 = vlaneseq
    %v1607 = vshrl.u32 %v1606, 7
    %v1608 = vsub.s32 0, %v1607
    %v1609 = vrot.slane %v1604, %v1608
    %v1610 = vlaneseq
    %v1611 = vshrl.u32 %v1610, 7
    %v1612 = vsub.s32 1, %v1611
    %v1613 = vrot.slane %v1604, %v1612
    %v1614 = vlaneseq
    %v1615 = vshrl.u32 %v1614, 7
    %v1616 = vsub.s32 2, %v1615
    %v1617 = vrot.slane %v1604, %v1616
    %v1618 = vlaneseq
    %v1619 = vshrl.u32 %v1618, 7
    %v1620 = vsub.s32 3, %v1619
    %v1621 = vrot.slane %v1604, %v1620
    %v1626 = vadd.f32 %v1600, %v1609
    %v1627 = vadd.f32 %v1601, %v1613
    %v1628 = vadd.f32 %v1602, %v1617
    %v1629 = vadd.f32 %v1603, %v1621
    %v1630 = vxor.u32 %v1626, 2147483648
    %v1631 = vxor.u32 %v1627, 2147483648
    %v1632 = vxor.u32 %v1628, 2147483648
    %v1633 = vmul.f32 %v1630, 1.442695
    %v1634 = vpow.pop %v1633
    %v1635 = vmul.f32 %v1631, 1.442695
    %v1636 = vpow.pop %v1635
    %v1637 = vmul.f32 %v1632, 1.442695
    %v1638 = vpow.pop %v1637
    %v1639 = vadd.f32 %v1634, 1.0
    %v1640 = vadd.f32 %v1636, 1.0
    %v1641 = vadd.f32 %v1638, 1.0
    %v1642 = vrcp.pop %v1639
    %v1643 = vmul.f32 1.0, %v1642
    %v1644 = vrcp.pop %v1640
    %v1645 = vmul.f32 1.0, %v1644
    %v1646 = vrcp.pop %v1641
    %v1647 = vmul.f32 1.0, %v1646
    %v1648 = vtanh.pop %v1629
    %v1649 = vmul.f32 %v1645, %v839
    %v1650 = vmul.f32 %v1643, %v1648
    %v1651 = vadd.f32 %v1649, %v1650
    %v1652 = vtanh.pop %v1651
    %v1653 = vmul.f32 %v1647, %v1652
    %s1654 = scalar_lea.vmem [#allocation14], 8
    %1655 = vst [vmem:[%s1654] sm:$0xff] %v1653
    %s1656 = scalar_lea.vmem [#allocation15], 8
    %1657 = vst [vmem:[%s1656] sm:$0xff] %v1651
    %v1658 = vadd.f32 %v833, %v1653
    %v1659 = vpack.c.bf16 %v1658, %v1658
    %v1660 = vld [vmem:[#allocation13] sm:$0xff]
    %v1661 = vld [vmem:[#allocation13 + $0x8] sm:$0xff]
    %v1662 = vld [vmem:[#allocation13 + $0x10] sm:$0xff]
    %v1663 = vld [vmem:[#allocation13 + $0x18] sm:$0xff]
    %v1664 = vld [vmem:[#allocation13 + $0x20] sm:$0xff]
    %v1665 = vld [vmem:[#allocation13 + $0x28] sm:$0xff]
    %v1666 = vld [vmem:[#allocation13 + $0x30] sm:$0xff]
    %v1667 = vld [vmem:[#allocation13 + $0x38] sm:$0xff]
    %v1668 = vld [vmem:[#allocation13 + $0x40] sm:$0xff]
    %v1669 = vld [vmem:[#allocation13 + $0x48] sm:$0xff]
    %v1670 = vld [vmem:[#allocation13 + $0x50] sm:$0xff]
    %v1671 = vld [vmem:[#allocation13 + $0x58] sm:$0xff]
    %v1672 = vld [vmem:[#allocation13 + $0x60] sm:$0xff]
    %v1673 = vld [vmem:[#allocation13 + $0x68] sm:$0xff]
    %v1674 = vld [vmem:[#allocation13 + $0x70] sm:$0xff]
    %v1675 = vld [vmem:[#allocation13 + $0x78] sm:$0xff]
    %v1676 = vld [vmem:[%s12] sm:$0x3]
    %v1678 = vlaneseq
    %v1679 = vshrl.u32 %v1678, 7
    %v1680 = vsub.s32 0, %v1679
    %v1681 = vrot.slane %v1676, %v1680
    %v1682 = vlaneseq
    %v1683 = vshrl.u32 %v1682, 7
    %v1684 = vsub.s32 1, %v1683
    %v1685 = vrot.slane %v1676, %v1684
    %v1704 = vunpack.c.l.b16 %v1660
    %v1705 = vunpack.c.h.b16 %v1660
    %v1706 = vunpack.c.l.b16 %v1661
    %v1707 = vunpack.c.h.b16 %v1661
    %v1708 = vunpack.c.l.b16 %v1662
    %v1709 = vunpack.c.h.b16 %v1662
    %v1710 = vunpack.c.l.b16 %v1663
    %v1711 = vunpack.c.h.b16 %v1663
    %v1712 = vunpack.c.l.b16 %v1664
    %v1713 = vunpack.c.h.b16 %v1664
    %v1714 = vunpack.c.l.b16 %v1665
    %v1715 = vunpack.c.h.b16 %v1665
    %v1716 = vunpack.c.l.b16 %v1666
    %v1717 = vunpack.c.h.b16 %v1666
    %v1718 = vunpack.c.l.b16 %v1667
    %v1719 = vunpack.c.h.b16 %v1667
    %v1720 = vunpack.c.l.b16 %v1668
    %v1721 = vunpack.c.h.b16 %v1668
    %v1722 = vunpack.c.l.b16 %v1669
    %v1723 = vunpack.c.h.b16 %v1669
    %v1724 = vunpack.c.l.b16 %v1670
    %v1725 = vunpack.c.h.b16 %v1670
    %v1726 = vunpack.c.l.b16 %v1671
    %v1727 = vunpack.c.h.b16 %v1671
    %v1728 = vunpack.c.l.b16 %v1672
    %v1729 = vunpack.c.h.b16 %v1672
    %v1730 = vunpack.c.l.b16 %v1673
    %v1731 = vunpack.c.h.b16 %v1673
    %v1732 = vunpack.c.l.b16 %v1674
    %v1733 = vunpack.c.h.b16 %v1674
    %v1734 = vunpack.c.l.b16 %v1675
    %v1735 = vunpack.c.h.b16 %v1675
    %v1736 = vpack.c.b16 %v1706, %v1704
    %v1737 = vpack.c.b16 %v1707, %v1705
    %v1738 = vpack.c.b16 %v1710, %v1708
    %v1739 = vpack.c.b16 %v1711, %v1709
    %v1740 = vpack.c.b16 %v1714, %v1712
    %v1741 = vpack.c.b16 %v1715, %v1713
    %v1742 = vpack.c.b16 %v1718, %v1716
    %v1743 = vpack.c.b16 %v1719, %v1717
    %v1744 = vpack.c.b16 %v1722, %v1720
    %v1745 = vpack.c.b16 %v1723, %v1721
    %v1746 = vpack.c.b16 %v1726, %v1724
    %v1747 = vpack.c.b16 %v1727, %v1725
    %v1748 = vpack.c.b16 %v1730, %v1728
    %v1749 = vpack.c.b16 %v1731, %v1729
    %v1750 = vpack.c.b16 %v1734, %v1732
    %v1751 = vpack.c.b16 %v1735, %v1733
    %1768 = vmatprep.subr.bf16.mxu0 %v1737
    %1769 = vmatpush1.bf16.msra.mxu0 %v1736
    %1770 = vmatprep.subr.bf16.mxu0 %v1739
    %1771 = vmatpush1.bf16.msra.mxu0 %v1738
    %1772 = vmatprep.subr.bf16.mxu0 %v1741
    %1773 = vmatpush1.bf16.msra.mxu0 %v1740
    %1774 = vmatprep.subr.bf16.mxu0 %v1743
    %1775 = vmatpush1.bf16.msra.mxu0 %v1742
    %1776 = vmatprep.subr.bf16.mxu0 %v1745
    %1777 = vmatpush1.bf16.msra.mxu0 %v1744
    %1778 = vmatprep.subr.bf16.mxu0 %v1747
    %1779 = vmatpush1.bf16.msra.mxu0 %v1746
    %1780 = vmatprep.subr.bf16.mxu0 %v1749
    %1781 = vmatpush1.bf16.msra.mxu0 %v1748
    %1782 = vmatprep.subr.bf16.mxu0 %v1751
    %1783 = vmatpush1.bf16.msra.mxu0 %v1750
    %1784 = vmatprep.subr.bf16.mxu0 0
    %1785 = vmatpush1.bf16.msra.mxu0 0
    %1786 = vmatprep.subr.bf16.mxu0 0
    %1787 = vmatpush1.bf16.msra.mxu0 0
    %1788 = vmatprep.subr.bf16.mxu0 0
    %1789 = vmatpush1.bf16.msra.mxu0 0
    %1790 = vmatprep.subr.bf16.mxu0 0
    %1791 = vmatpush1.bf16.msra.mxu0 0
    %1792 = vmatprep.subr.bf16.mxu0 0
    %1793 = vmatpush1.bf16.msra.mxu0 0
    %1794 = vmatprep.subr.bf16.mxu0 0
    %1795 = vmatpush1.bf16.msra.mxu0 0
    %1796 = vmatprep.subr.bf16.mxu0 0
    %1797 = vmatpush1.bf16.msra.mxu0 0
    %1798 = vmatprep.subr.bf16.mxu0 0
    %1799 = vmatpush1.bf16.msra.mxu0 0
    %1800 = vmatprep.mubr.bf16.mxu0 0
    %1801 = vmatmul.mubr.bf16.gmra.mrb[0].mxu0 %v1659
    %v1802 = vpop.f32.mrb[0].mxu0
    %v1803 = vadd.f32 %v1681, %v1802
    %v1804 = vpop.f32.mrb[0].mxu0
    %v1805 = vadd.f32 %v1685, %v1804
    %v1806 = vpop.f32.mrb[0].mxu0
    %v1807 = vpop.f32.mrb[0].mxu0
    %1808 = vdwg.mxu0
    %1809 = vst [vmem:[#allocation17] sm:$0xff] %v1803
    %1810 = vst [vmem:[#allocation17 + $0x8] sm:$0xff] %v1805
    // Predicated region
    $region82: #{sentiment_neuron_forward.1} parent=1 // pred_check
      _
    $region83: #{sentiment_neuron_forward.1} parent=1 // pred_check_branch
      %1812 = sbr.rel (0) target = $region85
    $region84: #{sentiment_neuron_forward.1} parent=1 // pred_region
      %s1814 = ssub.s32 256, 256
      %1815 = vsyncadd [#allocation4], %s1814
      %s1816 = sshll.u32 [#allocation14], 4
      %s1817 = int_to_ptr.vmem [resolvable:$true] %s1816
      %1822 = dma.vmem_to_hbm [thread:$0]  %s1817, 256, %s13, [#allocation4], 128, 128, 8
    $region85: #{sentiment_neuron_forward.1} parent=1 // pred_fallthru
      _
    // Predicated region
    $region86: #{sentiment_neuron_forward.1} parent=1 // pred_check
      _
    $region87: #{sentiment_neuron_forward.1} parent=1 // pred_check_branch
      %1824 = sbr.rel (0) target = $region89
    $region88: #{sentiment_neuron_forward.1} parent=1 // pred_region
      %s1826 = ssub.s32 256, 256
      %1827 = vsyncadd [#allocation16], %s1826
      %s1828 = sshll.u32 [#allocation15], 4
      %s1829 = int_to_ptr.vmem [resolvable:$true] %s1828
      %1834 = dma.vmem_to_hbm [thread:$0]  %s1829, 256, %s14, [#allocation16], 128, 128, 8
    $region89: #{sentiment_neuron_forward.1} parent=1 // pred_fallthru
      _
    // Predicated region
    $region90: #{sentiment_neuron_forward.1} parent=1 // pred_check
      _
    $region91: #{sentiment_neuron_forward.1} parent=1 // pred_check_branch
      %1836 = sbr.rel (0) target = $region93
    $region92: #{sentiment_neuron_forward.1} parent=1 // pred_region
      %s1838 = ssub.s32 256, 256
      %1839 = vsyncadd [#allocation16], %s1838
      %s1841 = sshll.u32 [#allocation17], 4
      %s1842 = int_to_ptr.vmem [resolvable:$true] %s1841
      %1844 = dma.vmem_to_hbm [thread:$0]  %s1842, 256, %s15, [#allocation16]
    $region93: #{sentiment_neuron_forward.1} parent=1 // pred_fallthru
      _
    // Predicated region
    $region94: #{sentiment_neuron_forward.1} parent=1 // pred_check
      _
    $region95: #{sentiment_neuron_forward.1} parent=1 // pred_check_branch
      %1846 = sbr.rel (0) target = $region97
    $region96: #{sentiment_neuron_forward.1} parent=1 // pred_region
      %1847 = dma.done [#allocation4], 256
    $region97: #{sentiment_neuron_forward.1} parent=1 // pred_fallthru
      _
    // Predicated region
    $region98: #{sentiment_neuron_forward.1} parent=1 // pred_check
      _
    $region99: #{sentiment_neuron_forward.1} parent=1 // pred_check_branch
      %1849 = sbr.rel (0) target = $region101
    $region100: #{sentiment_neuron_forward.1} parent=1 // pred_region
      %1850 = dma.done [#allocation16], 256
    $region101: #{sentiment_neuron_forward.1} parent=1 // pred_fallthru
      _
    // Predicated region
    $region102: #{sentiment_neuron_forward.1} parent=1 // pred_check
      _
    $region103: #{sentiment_neuron_forward.1} parent=1 // pred_check_branch
      %1852 = sbr.rel (0) target = $region105
    $region104: #{sentiment_neuron_forward.1} parent=1 // pred_region
      %1853 = dma.done [#allocation16], 256
    $region105: #{sentiment_neuron_forward.1} parent=1 // pred_fallthru
      _
    %1854 = vsyncpa [#allocation3], 1
    %1855 = vsyncpa [#allocation6], 1
    %1856 = vsyncpa [#allocation9], 1
    %1857 = vsyncpa [#allocation12], 1
    %1858 = vsyncpa [#allocation4], 1
    %1859 = vsyncpa [#allocation16], 1

</llo_original>
